<compile_context>
chip_gen: v7x
topology: tpu7x:2x2x1
jax: 0.10.0
libtpu: 0.0.40
codegen_flags: <defaults>
</compile_context>

<pallas_src>
import math

import jax
import jax.numpy as jnp
import numpy as np
from jax.experimental import pallas as pl
from jax.experimental.pallas import tpu as pltpu

_S = 64                              # rows per angle-addition group (multiple of 8)
_MAX_TILE_ROWS = 2048                # packed rows per grid step (upper bound)
_VMEM_OUT_BUDGET = 8 * 1024 * 1024   # bytes for double-buffered cos+sin tiles
_MAX_LANES = 512                     # cap on packed lane width


def _rotary_table_kernel(theta_a_ref, theta_b_ref, cos_ref, sin_ref):
    """cos/sin of (theta_A + theta_B) via the angle-addition identity.

    theta_a_ref: (bpt, 1, lanes)  per-row-group base angles (this tile's blocks)
    theta_b_ref: (1,  S, lanes)   within-group angles (identical for every tile)
    cos_ref / sin_ref: (bpt, S, lanes)
    """
    theta_a = theta_a_ref[...]
    theta_b = theta_b_ref[...]
    cos_a, sin_a = jnp.cos(theta_a), jnp.sin(theta_a)     # small: bpt*lanes elems
    cos_b, sin_b = jnp.cos(theta_b), jnp.sin(theta_b)     # small: S*lanes elems
    # Full-tile work is 4 mul + 2 add per element (VPU), not transcendentals.
    cos_ref[...] = (cos_a * cos_b - sin_a * sin_b).astype(cos_ref.dtype)
    sin_ref[...] = (sin_a * cos_b + cos_a * sin_b).astype(sin_ref.dtype)


def rotary_forward(x, inv_freq, *, out_dtype=jnp.float32):
    """Returns (cos, sin) with shapes (1, T, 1, dim//2)."""
    seq_len = int(x.shape[1])
    half = int(inv_freq.shape[0])
    inv_freq = inv_freq.astype(jnp.float32)

    # ---- lane packing: make the kernel's last dim a multiple of 128 ---------
    pack = 128 // math.gcd(half, 128)          # == lcm(half, 128) // half
    lanes = half * pack
    if lanes > _MAX_LANES:
        # Rare fallback (e.g. half = 80): still correct, just masked stores.
        pack, lanes = 1, half

    rows = pl.cdiv(seq_len, pack)              # packed rows (pack positions each)
    n_blocks = pl.cdiv(rows, _S)               # row groups of S rows

    # ---- tile / grid selection ----------------------------------------------
    max_rows = min(_MAX_TILE_ROWS, _VMEM_OUT_BUDGET // (lanes * 4 * 2 * 2))
    max_bpt = max(1, max_rows // _S)
    desired_steps = min(4, n_blocks)           # >= 2 steps keeps both v7x TCs busy
    bpt = max(1, min(max_bpt, pl.cdiv(n_blocks, desired_steps)))
    grid = (pl.cdiv(n_blocks, bpt),)

    # ---- tiny precomputed angle seeds (O(N / S) + O(S) elements) -------------
    # lane l -> frequency index (l % half), packed position offset (l // half)
    inv_freq_packed = jnp.tile(inv_freq, pack)                        # (lanes,)
    lane_pos = (np.arange(lanes) // half).astype(np.float32)          # (lanes,)
    pos_b = np.arange(_S, dtype=np.float32)[:, None] * float(pack) + lane_pos[None, :]
    theta_b = (jnp.asarray(pos_b) * inv_freq_packed[None, :]).reshape(1, _S, lanes)
    block_base = (np.arange(n_blocks, dtype=np.float64) * (_S * pack)).astype(np.float32)
    theta_a = (jnp.asarray(block_base)[:, None] * inv_freq_packed[None, :]
               ).reshape(n_blocks, 1, lanes)

    n_out = n_blocks * _S * lanes
    cos_p, sin_p = pl.pallas_call(
        _rotary_table_kernel,
        out_shape=(
            jax.ShapeDtypeStruct((n_blocks, _S, lanes), out_dtype),
            jax.ShapeDtypeStruct((n_blocks, _S, lanes), out_dtype),
        ),
        grid=grid,
        in_specs=[
            pl.BlockSpec((bpt, 1, lanes), lambda i: (i, 0, 0)),
            pl.BlockSpec((1, _S, lanes), lambda i: (0, 0, 0)),
        ],
        out_specs=(
            pl.BlockSpec((bpt, _S, lanes), lambda i: (i, 0, 0)),
            pl.BlockSpec((bpt, _S, lanes), lambda i: (i, 0, 0)),
        ),
        compiler_params=pltpu.CompilerParams(
            dimension_semantics=("parallel",)),
        cost_estimate=pl.CostEstimate(
            flops=6 * n_out,
            transcendentals=2 * (n_blocks + _S * grid[0]) * lanes,
            bytes_accessed=2 * n_out * jnp.dtype(out_dtype).itemsize
            + (n_blocks + _S) * lanes * 4),
    )(theta_a, theta_b)

    # Contiguous reshape (layout-preserving, free).  Only slice the padding tail
    # when it actually exists (a real slice forces an extra HBM copy).
    total_pos = n_blocks * _S * pack
    cos2d = cos_p.reshape(total_pos, half)
    sin2d = sin_p.reshape(total_pos, half)
    if total_pos != seq_len:
        cos2d = cos2d[:seq_len]
        sin2d = sin2d[:seq_len]
    return cos2d[None, :, None, :], sin2d[None, :, None, :]


def make_inv_freq(dim, base=10000.0):
    # Deterministic parameter init, identical to the PyTorch buffer.
    return 1.0 / (base ** (jnp.arange(0, dim, 2, dtype=jnp.float32) / dim))


if __name__ == "__main__":
    key = jax.random.PRNGKey(0)

    # --- Small test matching the nanogpt usage shapes ---
    B, T, n_head, head_dim = 2, 8, 4, 32
    x = jax.random.normal(key, (B, T, n_head, head_dim), dtype=jnp.float32)
    inv_freq = make_inv_freq(head_dim)

    cos, sin = rotary_forward(x, inv_freq)
    cos = jax.block_until_ready(cos)
    sin = jax.block_until_ready(sin)

    t = jnp.arange(T, dtype=jnp.float32)
    freqs_ref = jnp.outer(t, inv_freq)
    cos_ref = jnp.cos(freqs_ref)[None, :, None, :]
    sin_ref = jnp.sin(freqs_ref)[None, :, None, :]

    assert cos.shape == (1, T, 1, head_dim // 2)
    assert sin.shape == (1, T, 1, head_dim // 2)
    assert jnp.allclose(cos, cos_ref, atol=1e-5), float(jnp.max(jnp.abs(cos - cos_ref)))
    assert jnp.allclose(sin, sin_ref, atol=1e-5), float(jnp.max(jnp.abs(sin - sin_ref)))

    # --- Larger test: multi-step grid + lane packing + angle-addition path ---
    T2, hd2 = 2048, 64
    x2 = jnp.zeros((1, T2, 1, hd2), dtype=jnp.float32)
    inv2 = make_inv_freq(hd2)
    cos2, sin2 = rotary_forward(x2, inv2)
    cos2 = jax.block_until_ready(cos2)
    sin2 = jax.block_until_ready(sin2)

    t2 = np.arange(T2, dtype=np.float32)
    inv2_np = np.asarray(inv2, dtype=np.float32)
    freqs2 = (t2[:, None] * inv2_np[None, :]).astype(np.float32).astype(np.float64)
    assert cos2.shape == (1, T2, 1, hd2 // 2)
    assert np.allclose(np.asarray(cos2)[0, :, 0, :], np.cos(freqs2), atol=5e-3)
    assert np.allclose(np.asarray(sin2)[0, :, 0, :], np.sin(freqs2), atol=5e-3)

    print("KERNEL_OK")
</pallas_src>

<mosaic_0001>
module attributes {stable_mosaic.version = 11 : i64} {
  func.func @_rotary_table_kernel(%arg0: i32, %arg1: memref<1x1x128xf32, #tpu.memory_space<vmem>>, %arg2: memref<1x64x128xf32, #tpu.memory_space<vmem>>, %arg3: memref<1x64x128xf32, #tpu.memory_space<vmem>>, %arg4: memref<1x64x128xf32, #tpu.memory_space<vmem>>) attributes {dimension_semantics = [#tpu.dimension_semantics<parallel>], iteration_bounds = array<i64: 1>, scalar_prefetch = 0 : i64, scratch_operands = 0 : i64, tpu.core_type = #tpu.core_type<tc>, window_params = [{transform_indices = @transform_0, window_bounds = array<i64: 1, 1, 128>}, {pipeline_mode = #tpu.pipeline_mode<synchronous>, transform_indices = @transform_1, window_bounds = array<i64: 1, 64, 128>}, {transform_indices = @transform_2, window_bounds = array<i64: 1, 64, 128>}, {transform_indices = @transform_3, window_bounds = array<i64: 1, 64, 128>}]} {
    %c0 = arith.constant 0 : index
    %c0_0 = arith.constant 0 : index
    %c0_1 = arith.constant 0 : index
    %0 = vector.load %arg1[%c0, %c0_0, %c0_1] : memref<1x1x128xf32, #tpu.memory_space<vmem>>, vector<1x1x128xf32>
    %c0_2 = arith.constant 0 : index
    %c0_3 = arith.constant 0 : index
    %c0_4 = arith.constant 0 : index
    %1 = vector.load %arg2[%c0_2, %c0_3, %c0_4] : memref<1x64x128xf32, #tpu.memory_space<vmem>>, vector<1x64x128xf32>
    %2 = math.cos %0 : vector<1x1x128xf32>
    %3 = math.sin %0 : vector<1x1x128xf32>
    %4 = math.cos %1 : vector<1x64x128xf32>
    %5 = math.sin %1 : vector<1x64x128xf32>
    %6 = vector.broadcast %2 : vector<1x1x128xf32> to vector<1x64x128xf32>
    %7 = arith.mulf %6, %4 : vector<1x64x128xf32>
    %8 = vector.broadcast %3 : vector<1x1x128xf32> to vector<1x64x128xf32>
    %9 = arith.mulf %8, %5 : vector<1x64x128xf32>
    %10 = arith.subf %7, %9 : vector<1x64x128xf32>
    %c0_5 = arith.constant 0 : index
    %c0_6 = arith.constant 0 : index
    %c0_7 = arith.constant 0 : index
    %11 = vector.load %arg3[%c0_5, %c0_6, %c0_7] : memref<1x64x128xf32, #tpu.memory_space<vmem>>, vector<1x64x128xf32>
    tpu.vector_store %arg3[%c0_5, %c0_6, %c0_7], %10 {strides = array<i32>} : memref<1x64x128xf32, #tpu.memory_space<vmem>>, vector<1x64x128xf32>,
    %12 = vector.broadcast %3 : vector<1x1x128xf32> to vector<1x64x128xf32>
    %13 = arith.mulf %12, %4 : vector<1x64x128xf32>
    %14 = vector.broadcast %2 : vector<1x1x128xf32> to vector<1x64x128xf32>
    %15 = arith.mulf %14, %5 : vector<1x64x128xf32>
    %16 = arith.addf %13, %15 : vector<1x64x128xf32>
    %c0_8 = arith.constant 0 : index
    %c0_9 = arith.constant 0 : index
    %c0_10 = arith.constant 0 : index
    %17 = vector.load %arg4[%c0_8, %c0_9, %c0_10] : memref<1x64x128xf32, #tpu.memory_space<vmem>>, vector<1x64x128xf32>
    tpu.vector_store %arg4[%c0_8, %c0_9, %c0_10], %16 {strides = array<i32>} : memref<1x64x128xf32, #tpu.memory_space<vmem>>, vector<1x64x128xf32>,
    return
  }
  func.func @transform_0(%arg0: i32) -> (i32, i32, i32) {
    %c0_i32 = arith.constant 0 : i32
    %c0_i32_0 = arith.constant 0 : i32
    %c0_i32_1 = arith.constant 0 : i32
    return %arg0, %c0_i32, %c0_i32_0 : i32, i32, i32
  }
  func.func @transform_1(%arg0: i32) -> (i32, i32, i32) {
    %c0_i32 = arith.constant 0 : i32
    %c0_i32_0 = arith.constant 0 : i32
    %c0_i32_1 = arith.constant 0 : i32
    %c0_i32_2 = arith.constant 0 : i32
    return %c0_i32, %c0_i32_0, %c0_i32_1 : i32, i32, i32
  }
  func.func @transform_2(%arg0: i32) -> (i32, i32, i32) {
    %c0_i32 = arith.constant 0 : i32
    %c0_i32_0 = arith.constant 0 : i32
    %c0_i32_1 = arith.constant 0 : i32
    return %arg0, %c0_i32, %c0_i32_0 : i32, i32, i32
  }
  func.func @transform_3(%arg0: i32) -> (i32, i32, i32) {
    %c0_i32 = arith.constant 0 : i32
    %c0_i32_0 = arith.constant 0 : i32
    %c0_i32_1 = arith.constant 0 : i32
    return %arg0, %c0_i32, %c0_i32_0 : i32, i32, i32
  }
}

</mosaic_0001>

<llo_original>
// kernel: tpu_custom_call.1
$region0: #{tpu_custom_call.1}
  #allocation0 [shape = 'u32[]', space=smem, size = 0x4, offset = 0x4, fixed_abs, tag = 'smem constant byte address 0x4 - core index']
  #allocation1 [shape = 'u32[144,128]{1,0:T(1,128)}', space=vmem, size = 0x12000, scoped, tag = 'internal scratch']
  %s0 = inlined_call_operand.hbm [shape: f32[1,1,128], index: 0, kind: input, shape index: {}]
  %s1 = inlined_call_operand.hbm [shape: f32[1,64,128], index: 1, kind: input, shape index: {}]
  %s2 = inlined_call_operand.hbm [shape: f32[1,64,128], index: 2, kind: output, shape index: {0}]
  %s3 = inlined_call_operand.hbm [shape: f32[1,64,128], index: 3, kind: output, shape index: {1}]
  %4 = xla_tuple %s2, %s3
  %s5 = sld [smem:[#allocation0]]
  $region34: #{tpu_custom_call.1} parent=0
    _
  %s7 = ssub.s32 1, %s5
  %s8 = scalar_select 0, %s7, %s5
  $region1: #{tpu_custom_call.1} parent=0
    #allocation2 [shape = 'u8[512]{0}', space=vmem, size = 0x400, scoped, tag = 'input window, operand 0, single buffered']
    #allocation3 [shape = 's32[1]{0}', space=sflag, size = 0x4, scoped, tag = 'scoped memory for tpu_custom_call.1']
    #allocation4 [shape = 's32[1]{0}', space=sflag, size = 0x4, scoped, tag = 'scoped memory for tpu_custom_call.1']
    #allocation5 [shape = 'u8[32768]{0}', space=vmem, size = 0x8000, scoped, tag = 'input window, operand 1, single buffered']
    #allocation6 [shape = 's32[1]{0}', space=sflag, size = 0x4, scoped, tag = 'scoped memory for tpu_custom_call.1']
    #allocation7 [shape = 'u8[32768]{0}', space=vmem, size = 0x8000, scoped, tag = 'output window, operand 0, single buffered']
    #allocation8 [shape = 'u8[32768]{0}', space=vmem, size = 0x8000, scoped, tag = 'output window, operand 1, single buffered']
    #allocation9 [shape = 's32[1]{0}', space=sflag, size = 0x4, scoped, tag = 'scoped memory for tpu_custom_call.1']
    %9 = vsyncpa [#allocation3], 0
    %10 = vsyncpa [#allocation6], 0
    %11 = vsyncpa [#allocation4], 0
    %12 = vsyncpa [#allocation9], 0
    // Predicated region
    $region2: #{tpu_custom_call.1} parent=1 // pred_check
      _
    $region3: #{tpu_custom_call.1} parent=1 // pred_check_branch
      %14 = sbr.rel (0) target = $region5
    $region4: #{tpu_custom_call.1} parent=1 // pred_region
      %s16 = ssub.s32 16, 16
      %17 = vsyncadd [#allocation3], %s16
      %s19 = sshll.u32 [#allocation2], 4
      %s20 = int_to_ptr.vmem [resolvable:$true] %s19
      %22 = dma.hbm_to_vmem [thread:$0]  %s0, 16, %s20, [#allocation3]
    $region5: #{tpu_custom_call.1} parent=1 // pred_fallthru
      _
    // Predicated region
    $region6: #{tpu_custom_call.1} parent=1 // pred_check
      _
    $region7: #{tpu_custom_call.1} parent=1 // pred_check_branch
      %24 = sbr.rel (0) target = $region9
    $region8: #{tpu_custom_call.1} parent=1 // pred_region
      %s26 = ssub.s32 1024, 1024
      %27 = vsyncadd [#allocation6], %s26
      %s28 = sshll.u32 [#allocation5], 4
      %s29 = int_to_ptr.vmem [resolvable:$true] %s28
      %34 = dma.hbm_to_vmem [thread:$0]  %s1, 1024, %s29, [#allocation6], 128, 128, 8
    $region9: #{tpu_custom_call.1} parent=1 // pred_fallthru
      _
    // Predicated region
    $region10: #{tpu_custom_call.1} parent=1 // pred_check
      _
    $region11: #{tpu_custom_call.1} parent=1 // pred_check_branch
      %36 = sbr.rel (0) target = $region13
    $region12: #{tpu_custom_call.1} parent=1 // pred_region
      %37 = dma.done [#allocation3], 16
    $region13: #{tpu_custom_call.1} parent=1 // pred_fallthru
      _
    // Predicated region
    $region14: #{tpu_custom_call.1} parent=1 // pred_check
      _
    $region15: #{tpu_custom_call.1} parent=1 // pred_check_branch
      %39 = sbr.rel (0) target = $region17
    $region16: #{tpu_custom_call.1} parent=1 // pred_region
      %40 = dma.done [#allocation6], 1024
    $region17: #{tpu_custom_call.1} parent=1 // pred_fallthru
      _
    %v41 = vld [vmem:[#allocation2] sm:$0x1]
    %v42 = vld [vmem:[#allocation5] sm:$0xff]
    %v43 = vld [vmem:[#allocation5 + $0x8] sm:$0xff]
    %v44 = vld [vmem:[#allocation5 + $0x10] sm:$0xff]
    %v45 = vld [vmem:[#allocation5 + $0x18] sm:$0xff]
    %v46 = vld [vmem:[#allocation5 + $0x20] sm:$0xff]
    %v47 = vld [vmem:[#allocation5 + $0x28] sm:$0xff]
    %v48 = vld [vmem:[#allocation5 + $0x30] sm:$0xff]
    %v49 = vld [vmem:[#allocation5 + $0x38] sm:$0xff]
    %v50 = vand.u32 2147483647, %v41
    %vm51 = vcmp.le.f32.partialorder %v50, 0.7853982
    %vm52 = vcmp.lt.s32.totalorder %v41, 0
    %v53 = vand.u32 %v41, 2139095040
    %v54 = vshrl.u32 %v53, 23
    %v55 = vsub.s32 %v54, 127
    %v56 = vand.u32 2147483647, %v41
    %v57 = vand.u32 %v56, 8388607
    %v58 = vor.u32 %v57, 8388608
    %v59 = vsub.s32 0, %v58
    %v60 = vadd.s32 %v55, 1
    %vm61 = vcmp.gt.s32.totalorder %v60, 0
    %v62 = vsel %vm61, %v60, 0
    %v63 = vshrl.u32 %v62, 5
    %v64 = vand.u32 %v62, 31
    %v65 = vsub.s32 32, %v64
    %v66 = vshrl.u32 683565275, %v65
    %v67 = vshll.u32 683565275, %v64
    %v68 = vshrl.u32 2475754826, %v65
    %v69 = vor.u32 %v67, %v68
    %v70 = vshll.u32 2475754826, %v64
    %v71 = vshrl.u32 2131351028, %v65
    %v72 = vor.u32 %v70, %v71
    %v73 = vshll.u32 2131351028, %v64
    %v74 = vshrl.u32 2102212464, %v65
    %v75 = vor.u32 %v73, %v74
    %v76 = vshll.u32 2102212464, %v64
    %v77 = vshrl.u32 920167782, %v65
    %v78 = vor.u32 %v76, %v77
    %v79 = vshll.u32 920167782, %v64
    %v80 = vshrl.u32 1326507024, %v65
    %v81 = vor.u32 %v79, %v80
    %vm82 = vcmp.lt.s32.totalorder %v63, 1
    %vm83 = vcmp.lt.s32.totalorder %v63, 2
    %vm84 = vcmp.lt.s32.totalorder %v63, 3
    %vm85 = vcmp.lt.s32.totalorder %v63, 4
    %v86 = vsel %vm82, %v66, %v69
    %v87 = vsel %vm85, %v75, 2102212464
    %v88 = vsel %vm84, %v72, %v87
    %v89 = vsel %vm83, %v86, %v88
    %v90 = vsel %vm82, %v69, %v72
    %v91 = vsel %vm85, %v78, 920167782
    %v92 = vsel %vm84, %v75, %v91
    %v93 = vsel %vm83, %v90, %v92
    %v94 = vsel %vm82, %v72, %v75
    %v95 = vsel %vm85, %v81, 1326507024
    %v96 = vsel %vm84, %v78, %v95
    %v97 = vsel %vm83, %v94, %v96
    %v98 = vshll.u32 %v58, 8
    %v99 = vmul.u32.u64.compose %v98, %v97
    %v100 = vextract.low.u32 %v99
    %v101 = vextract.high.u32 %v99
    %v102 = vmul.u32.u64.compose %v98, %v93
    %v103 = vextract.low.u32 %v102
    %v104 = vextract.high.u32 %v102
    %v105 = vmul.u32 %v98, %v89
    %v106 = vadd.s32 %v101, %v103
    %vm107 = vc.u32 %v101, %v103
    %v108 = vadd.s32 %v104, 1
    %v109 = vsel %vm107, %v108, %v104
    %v110 = vadd.s32 %v105, %v109
    %v111 = vadd.s32 %v110, 536870912
    %v112 = vshrl.u32 %v111, 30
    %v113 = vshll.u32 %v112, 30
    %v114 = vsub.s32 %v110, %v113
    %vm115 = vcmp.lt.s32.totalorder %v114, 0
    %v116 = vsub.s32 0, %v114
    %v117 = vsel %vm115, %v116, %v114
    %v118 = vclz %v117
    %v119 = vsub.s32 %v118, 2
    %vm120 = vcmp.gt.s32.totalorder 0, %v119
    %v121 = vsel %vm120, 0, %v119
    %v122 = vsub.s32 32, %v121
    %v123 = vshll.u32 %v114, %v121
    %v124 = vshrl.u32 %v106, %v122
    %v125 = vor.u32 %v123, %v124
    %v126 = vsub.s32 4294967266, %v121
    %v127 = vadd.s32 %v126, 127
    %v128 = vshll.u32 %v127, 23
    %v129 = vor.u32 4788187, %v128
    %v130 = vand.u32 2147483647, %v129
    %v132 = vcvt.s32.f32 %v125
    %v133 = vmul.f32 %v132, %v130
    %v134 = vxor.u32 %v133, 2147483648
    %v135 = vsel %vm52, %v134, %v133
    %v136 = vsub.s32 4, %v112
    %v137 = vsel %vm52, %v136, %v112
    %v138 = vsel %vm51, %v41, %v135
    %v139 = vsel %vm51, 0, %v137
    %v140 = vcosq.f32.pop %v138
    %v141 = vsinq.f32.pop %v138
    %vm142 = vweird.f32 %v41
    %v143 = vand.u32 %v139, 3
    %vm144 = vcmp.lt.s32.totalorder %v143, 2
    %vm145 = vcmp.eq.s32.totalorder %v143, 0
    %v146 = vxor.u32 %v141, 2147483648
    %v147 = vsel %vm145, %v140, %v146
    %vm148 = vcmp.eq.s32.totalorder %v143, 2
    %v149 = vxor.u32 %v140, 2147483648
    %v150 = vsel %vm148, %v149, %v141
    %v151 = vsel %vm144, %v147, %v150
    %v152 = vsel %vm142, nan, %v151
    %v153 = vand.u32 2147483647, %v41
    %vm154 = vcmp.le.f32.partialorder %v153, 0.7853982
    %vm155 = vcmp.lt.s32.totalorder %v41, 0
    %v156 = vand.u32 %v41, 2139095040
    %v157 = vshrl.u32 %v156, 23
    %v158 = vsub.s32 %v157, 127
    %v159 = vand.u32 2147483647, %v41
    %v160 = vand.u32 %v159, 8388607
    %v161 = vor.u32 %v160, 8388608
    %v162 = vsub.s32 0, %v161
    %v163 = vadd.s32 %v158, 1
    %vm164 = vcmp.gt.s32.totalorder %v163, 0
    %v165 = vsel %vm164, %v163, 0
    %v166 = vshrl.u32 %v165, 5
    %v167 = vand.u32 %v165, 31
    %v168 = vsub.s32 32, %v167
    %v169 = vshrl.u32 683565275, %v168
    %v170 = vshll.u32 683565275, %v167
    %v171 = vshrl.u32 2475754826, %v168
    %v172 = vor.u32 %v170, %v171
    %v173 = vshll.u32 2475754826, %v167
    %v174 = vshrl.u32 2131351028, %v168
    %v175 = vor.u32 %v173, %v174
    %v176 = vshll.u32 2131351028, %v167
    %v177 = vshrl.u32 2102212464, %v168
    %v178 = vor.u32 %v176, %v177
    %v179 = vshll.u32 2102212464, %v167
    %v180 = vshrl.u32 920167782, %v168
    %v181 = vor.u32 %v179, %v180
    %v182 = vshll.u32 920167782, %v167
    %v183 = vshrl.u32 1326507024, %v168
    %v184 = vor.u32 %v182, %v183
    %vm185 = vcmp.lt.s32.totalorder %v166, 1
    %vm186 = vcmp.lt.s32.totalorder %v166, 2
    %vm187 = vcmp.lt.s32.totalorder %v166, 3
    %vm188 = vcmp.lt.s32.totalorder %v166, 4
    %v189 = vsel %vm185, %v169, %v172
    %v190 = vsel %vm188, %v178, 2102212464
    %v191 = vsel %vm187, %v175, %v190
    %v192 = vsel %vm186, %v189, %v191
    %v193 = vsel %vm185, %v172, %v175
    %v194 = vsel %vm188, %v181, 920167782
    %v195 = vsel %vm187, %v178, %v194
    %v196 = vsel %vm186, %v193, %v195
    %v197 = vsel %vm185, %v175, %v178
    %v198 = vsel %vm188, %v184, 1326507024
    %v199 = vsel %vm187, %v181, %v198
    %v200 = vsel %vm186, %v197, %v199
    %v201 = vshll.u32 %v161, 8
    %v202 = vmul.u32.u64.compose %v201, %v200
    %v203 = vextract.low.u32 %v202
    %v204 = vextract.high.u32 %v202
    %v205 = vmul.u32.u64.compose %v201, %v196
    %v206 = vextract.low.u32 %v205
    %v207 = vextract.high.u32 %v205
    %v208 = vmul.u32 %v201, %v192
    %v209 = vadd.s32 %v204, %v206
    %vm210 = vc.u32 %v204, %v206
    %v211 = vadd.s32 %v207, 1
    %v212 = vsel %vm210, %v211, %v207
    %v213 = vadd.s32 %v208, %v212
    %v214 = vadd.s32 %v213, 536870912
    %v215 = vshrl.u32 %v214, 30
    %v216 = vshll.u32 %v215, 30
    %v217 = vsub.s32 %v213, %v216
    %vm218 = vcmp.lt.s32.totalorder %v217, 0
    %v219 = vsub.s32 0, %v217
    %v220 = vsel %vm218, %v219, %v217
    %v221 = vclz %v220
    %v222 = vsub.s32 %v221, 2
    %vm223 = vcmp.gt.s32.totalorder 0, %v222
    %v224 = vsel %vm223, 0, %v222
    %v225 = vsub.s32 32, %v224
    %v226 = vshll.u32 %v217, %v224
    %v227 = vshrl.u32 %v209, %v225
    %v228 = vor.u32 %v226, %v227
    %v229 = vsub.s32 4294967266, %v224
    %v230 = vadd.s32 %v229, 127
    %v231 = vshll.u32 %v230, 23
    %v232 = vor.u32 4788187, %v231
    %v233 = vand.u32 2147483647, %v232
    %v235 = vcvt.s32.f32 %v228
    %v236 = vmul.f32 %v235, %v233
    %v237 = vxor.u32 %v236, 2147483648
    %v238 = vsel %vm155, %v237, %v236
    %v239 = vsub.s32 4, %v215
    %v240 = vsel %vm155, %v239, %v215
    %v241 = vsel %vm154, %v41, %v238
    %v242 = vsel %vm154, 0, %v240
    %v243 = vcosq.f32.pop %v241
    %v244 = vsinq.f32.pop %v241
    %vm245 = vweird.f32 %v41
    %v246 = vadd.s32 %v242, 3
    %v247 = vand.u32 %v246, 3
    %vm248 = vcmp.lt.s32.totalorder %v247, 2
    %vm249 = vcmp.eq.s32.totalorder %v247, 0
    %v250 = vxor.u32 %v244, 2147483648
    %v251 = vsel %vm249, %v243, %v250
    %vm252 = vcmp.eq.s32.totalorder %v247, 2
    %v253 = vxor.u32 %v243, 2147483648
    %v254 = vsel %vm252, %v253, %v244
    %v255 = vsel %vm248, %v251, %v254
    %v256 = vsel %vm245, nan, %v255
    %v257 = vand.u32 2147483647, %v42
    %vm258 = vcmp.le.f32.partialorder %v257, 0.7853982
    %vm259 = vcmp.lt.s32.totalorder %v42, 0
    %v260 = vand.u32 %v42, 2139095040
    %v261 = vshrl.u32 %v260, 23
    %v262 = vsub.s32 %v261, 127
    %v263 = vand.u32 2147483647, %v42
    %v264 = vand.u32 %v263, 8388607
    %v265 = vor.u32 %v264, 8388608
    %v266 = vsub.s32 0, %v265
    %v267 = vadd.s32 %v262, 1
    %vm268 = vcmp.gt.s32.totalorder %v267, 0
    %v269 = vsel %vm268, %v267, 0
    %v270 = vshrl.u32 %v269, 5
    %v271 = vand.u32 %v269, 31
    %v272 = vsub.s32 32, %v271
    %v273 = vshrl.u32 683565275, %v272
    %v274 = vshll.u32 683565275, %v271
    %v275 = vshrl.u32 2475754826, %v272
    %v276 = vor.u32 %v274, %v275
    %v277 = vshll.u32 2475754826, %v271
    %v278 = vshrl.u32 2131351028, %v272
    %v279 = vor.u32 %v277, %v278
    %v280 = vshll.u32 2131351028, %v271
    %v281 = vshrl.u32 2102212464, %v272
    %v282 = vor.u32 %v280, %v281
    %v283 = vshll.u32 2102212464, %v271
    %v284 = vshrl.u32 920167782, %v272
    %v285 = vor.u32 %v283, %v284
    %v286 = vshll.u32 920167782, %v271
    %v287 = vshrl.u32 1326507024, %v272
    %v288 = vor.u32 %v286, %v287
    %vm289 = vcmp.lt.s32.totalorder %v270, 1
    %vm290 = vcmp.lt.s32.totalorder %v270, 2
    %vm291 = vcmp.lt.s32.totalorder %v270, 3
    %vm292 = vcmp.lt.s32.totalorder %v270, 4
    %v293 = vsel %vm289, %v273, %v276
    %v294 = vsel %vm292, %v282, 2102212464
    %v295 = vsel %vm291, %v279, %v294
    %v296 = vsel %vm290, %v293, %v295
    %v297 = vsel %vm289, %v276, %v279
    %v298 = vsel %vm292, %v285, 920167782
    %v299 = vsel %vm291, %v282, %v298
    %v300 = vsel %vm290, %v297, %v299
    %v301 = vsel %vm289, %v279, %v282
    %v302 = vsel %vm292, %v288, 1326507024
    %v303 = vsel %vm291, %v285, %v302
    %v304 = vsel %vm290, %v301, %v303
    %v305 = vshll.u32 %v265, 8
    %v306 = vmul.u32.u64.compose %v305, %v304
    %v307 = vextract.low.u32 %v306
    %v308 = vextract.high.u32 %v306
    %v309 = vmul.u32.u64.compose %v305, %v300
    %v310 = vextract.low.u32 %v309
    %v311 = vextract.high.u32 %v309
    %v312 = vmul.u32 %v305, %v296
    %v313 = vadd.s32 %v308, %v310
    %vm314 = vc.u32 %v308, %v310
    %v315 = vadd.s32 %v311, 1
    %v316 = vsel %vm314, %v315, %v311
    %v317 = vadd.s32 %v312, %v316
    %v318 = vadd.s32 %v317, 536870912
    %v319 = vshrl.u32 %v318, 30
    %v320 = vshll.u32 %v319, 30
    %v321 = vsub.s32 %v317, %v320
    %vm322 = vcmp.lt.s32.totalorder %v321, 0
    %v323 = vsub.s32 0, %v321
    %v324 = vsel %vm322, %v323, %v321
    %v325 = vclz %v324
    %v326 = vsub.s32 %v325, 2
    %vm327 = vcmp.gt.s32.totalorder 0, %v326
    %v328 = vsel %vm327, 0, %v326
    %v329 = vsub.s32 32, %v328
    %v330 = vshll.u32 %v321, %v328
    %v331 = vshrl.u32 %v313, %v329
    %v332 = vor.u32 %v330, %v331
    %v333 = vsub.s32 4294967266, %v328
    %v334 = vadd.s32 %v333, 127
    %v335 = vshll.u32 %v334, 23
    %v336 = vor.u32 4788187, %v335
    %v337 = vand.u32 2147483647, %v336
    %v339 = vcvt.s32.f32 %v332
    %v340 = vmul.f32 %v339, %v337
    %v341 = vxor.u32 %v340, 2147483648
    %v342 = vsel %vm259, %v341, %v340
    %v343 = vsub.s32 4, %v319
    %v344 = vsel %vm259, %v343, %v319
    %v345 = vsel %vm258, %v42, %v342
    %v346 = vsel %vm258, 0, %v344
    %v347 = vcosq.f32.pop %v345
    %v348 = vsinq.f32.pop %v345
    %vm349 = vweird.f32 %v42
    %v350 = vand.u32 %v346, 3
    %vm351 = vcmp.lt.s32.totalorder %v350, 2
    %vm352 = vcmp.eq.s32.totalorder %v350, 0
    %v353 = vxor.u32 %v348, 2147483648
    %v354 = vsel %vm352, %v347, %v353
    %vm355 = vcmp.eq.s32.totalorder %v350, 2
    %v356 = vxor.u32 %v347, 2147483648
    %v357 = vsel %vm355, %v356, %v348
    %v358 = vsel %vm351, %v354, %v357
    %v359 = vsel %vm349, nan, %v358
    %v360 = vand.u32 2147483647, %v43
    %vm361 = vcmp.le.f32.partialorder %v360, 0.7853982
    %vm362 = vcmp.lt.s32.totalorder %v43, 0
    %v363 = vand.u32 %v43, 2139095040
    %v364 = vshrl.u32 %v363, 23
    %v365 = vsub.s32 %v364, 127
    %v366 = vand.u32 2147483647, %v43
    %v367 = vand.u32 %v366, 8388607
    %v368 = vor.u32 %v367, 8388608
    %v369 = vsub.s32 0, %v368
    %v370 = vadd.s32 %v365, 1
    %vm371 = vcmp.gt.s32.totalorder %v370, 0
    %v372 = vsel %vm371, %v370, 0
    %v373 = vshrl.u32 %v372, 5
    %v374 = vand.u32 %v372, 31
    %v375 = vsub.s32 32, %v374
    %v376 = vshrl.u32 683565275, %v375
    %v377 = vshll.u32 683565275, %v374
    %v378 = vshrl.u32 2475754826, %v375
    %v379 = vor.u32 %v377, %v378
    %v380 = vshll.u32 2475754826, %v374
    %v381 = vshrl.u32 2131351028, %v375
    %v382 = vor.u32 %v380, %v381
    %v383 = vshll.u32 2131351028, %v374
    %v384 = vshrl.u32 2102212464, %v375
    %v385 = vor.u32 %v383, %v384
    %v386 = vshll.u32 2102212464, %v374
    %v387 = vshrl.u32 920167782, %v375
    %v388 = vor.u32 %v386, %v387
    %v389 = vshll.u32 920167782, %v374
    %v390 = vshrl.u32 1326507024, %v375
    %v391 = vor.u32 %v389, %v390
    %vm392 = vcmp.lt.s32.totalorder %v373, 1
    %vm393 = vcmp.lt.s32.totalorder %v373, 2
    %vm394 = vcmp.lt.s32.totalorder %v373, 3
    %vm395 = vcmp.lt.s32.totalorder %v373, 4
    %v396 = vsel %vm392, %v376, %v379
    %v397 = vsel %vm395, %v385, 2102212464
    %v398 = vsel %vm394, %v382, %v397
    %v399 = vsel %vm393, %v396, %v398
    %v400 = vsel %vm392, %v379, %v382
    %v401 = vsel %vm395, %v388, 920167782
    %v402 = vsel %vm394, %v385, %v401
    %v403 = vsel %vm393, %v400, %v402
    %v404 = vsel %vm392, %v382, %v385
    %v405 = vsel %vm395, %v391, 1326507024
    %v406 = vsel %vm394, %v388, %v405
    %v407 = vsel %vm393, %v404, %v406
    %v408 = vshll.u32 %v368, 8
    %v409 = vmul.u32.u64.compose %v408, %v407
    %v410 = vextract.low.u32 %v409
    %v411 = vextract.high.u32 %v409
    %v412 = vmul.u32.u64.compose %v408, %v403
    %v413 = vextract.low.u32 %v412
    %v414 = vextract.high.u32 %v412
    %v415 = vmul.u32 %v408, %v399
    %v416 = vadd.s32 %v411, %v413
    %vm417 = vc.u32 %v411, %v413
    %v418 = vadd.s32 %v414, 1
    %v419 = vsel %vm417, %v418, %v414
    %v420 = vadd.s32 %v415, %v419
    %v421 = vadd.s32 %v420, 536870912
    %v422 = vshrl.u32 %v421, 30
    %v423 = vshll.u32 %v422, 30
    %v424 = vsub.s32 %v420, %v423
    %vm425 = vcmp.lt.s32.totalorder %v424, 0
    %v426 = vsub.s32 0, %v424
    %v427 = vsel %vm425, %v426, %v424
    %v428 = vclz %v427
    %v429 = vsub.s32 %v428, 2
    %vm430 = vcmp.gt.s32.totalorder 0, %v429
    %v431 = vsel %vm430, 0, %v429
    %v432 = vsub.s32 32, %v431
    %v433 = vshll.u32 %v424, %v431
    %v434 = vshrl.u32 %v416, %v432
    %v435 = vor.u32 %v433, %v434
    %v436 = vsub.s32 4294967266, %v431
    %v437 = vadd.s32 %v436, 127
    %v438 = vshll.u32 %v437, 23
    %v439 = vor.u32 4788187, %v438
    %v440 = vand.u32 2147483647, %v439
    %v442 = vcvt.s32.f32 %v435
    %v443 = vmul.f32 %v442, %v440
    %v444 = vxor.u32 %v443, 2147483648
    %v445 = vsel %vm362, %v444, %v443
    %v446 = vsub.s32 4, %v422
    %v447 = vsel %vm362, %v446, %v422
    %v448 = vsel %vm361, %v43, %v445
    %v449 = vsel %vm361, 0, %v447
    %v450 = vcosq.f32.pop %v448
    %v451 = vsinq.f32.pop %v448
    %vm452 = vweird.f32 %v43
    %v453 = vand.u32 %v449, 3
    %vm454 = vcmp.lt.s32.totalorder %v453, 2
    %vm455 = vcmp.eq.s32.totalorder %v453, 0
    %v456 = vxor.u32 %v451, 2147483648
    %v457 = vsel %vm455, %v450, %v456
    %vm458 = vcmp.eq.s32.totalorder %v453, 2
    %v459 = vxor.u32 %v450, 2147483648
    %v460 = vsel %vm458, %v459, %v451
    %v461 = vsel %vm454, %v457, %v460
    %v462 = vsel %vm452, nan, %v461
    %v463 = vand.u32 2147483647, %v44
    %vm464 = vcmp.le.f32.partialorder %v463, 0.7853982
    %vm465 = vcmp.lt.s32.totalorder %v44, 0
    %v466 = vand.u32 %v44, 2139095040
    %v467 = vshrl.u32 %v466, 23
    %v468 = vsub.s32 %v467, 127
    %v469 = vand.u32 2147483647, %v44
    %v470 = vand.u32 %v469, 8388607
    %v471 = vor.u32 %v470, 8388608
    %v472 = vsub.s32 0, %v471
    %v473 = vadd.s32 %v468, 1
    %vm474 = vcmp.gt.s32.totalorder %v473, 0
    %v475 = vsel %vm474, %v473, 0
    %v476 = vshrl.u32 %v475, 5
    %v477 = vand.u32 %v475, 31
    %v478 = vsub.s32 32, %v477
    %v479 = vshrl.u32 683565275, %v478
    %v480 = vshll.u32 683565275, %v477
    %v481 = vshrl.u32 2475754826, %v478
    %v482 = vor.u32 %v480, %v481
    %v483 = vshll.u32 2475754826, %v477
    %v484 = vshrl.u32 2131351028, %v478
    %v485 = vor.u32 %v483, %v484
    %v486 = vshll.u32 2131351028, %v477
    %v487 = vshrl.u32 2102212464, %v478
    %v488 = vor.u32 %v486, %v487
    %v489 = vshll.u32 2102212464, %v477
    %v490 = vshrl.u32 920167782, %v478
    %v491 = vor.u32 %v489, %v490
    %v492 = vshll.u32 920167782, %v477
    %v493 = vshrl.u32 1326507024, %v478
    %v494 = vor.u32 %v492, %v493
    %vm495 = vcmp.lt.s32.totalorder %v476, 1
    %vm496 = vcmp.lt.s32.totalorder %v476, 2
    %vm497 = vcmp.lt.s32.totalorder %v476, 3
    %vm498 = vcmp.lt.s32.totalorder %v476, 4
    %v499 = vsel %vm495, %v479, %v482
    %v500 = vsel %vm498, %v488, 2102212464
    %v501 = vsel %vm497, %v485, %v500
    %v502 = vsel %vm496, %v499, %v501
    %v503 = vsel %vm495, %v482, %v485
    %v504 = vsel %vm498, %v491, 920167782
    %v505 = vsel %vm497, %v488, %v504
    %v506 = vsel %vm496, %v503, %v505
    %v507 = vsel %vm495, %v485, %v488
    %v508 = vsel %vm498, %v494, 1326507024
    %v509 = vsel %vm497, %v491, %v508
    %v510 = vsel %vm496, %v507, %v509
    %v511 = vshll.u32 %v471, 8
    %v512 = vmul.u32.u64.compose %v511, %v510
    %v513 = vextract.low.u32 %v512
    %v514 = vextract.high.u32 %v512
    %v515 = vmul.u32.u64.compose %v511, %v506
    %v516 = vextract.low.u32 %v515
    %v517 = vextract.high.u32 %v515
    %v518 = vmul.u32 %v511, %v502
    %v519 = vadd.s32 %v514, %v516
    %vm520 = vc.u32 %v514, %v516
    %v521 = vadd.s32 %v517, 1
    %v522 = vsel %vm520, %v521, %v517
    %v523 = vadd.s32 %v518, %v522
    %v524 = vadd.s32 %v523, 536870912
    %v525 = vshrl.u32 %v524, 30
    %v526 = vshll.u32 %v525, 30
    %v527 = vsub.s32 %v523, %v526
    %vm528 = vcmp.lt.s32.totalorder %v527, 0
    %v529 = vsub.s32 0, %v527
    %v530 = vsel %vm528, %v529, %v527
    %v531 = vclz %v530
    %v532 = vsub.s32 %v531, 2
    %vm533 = vcmp.gt.s32.totalorder 0, %v532
    %v534 = vsel %vm533, 0, %v532
    %v535 = vsub.s32 32, %v534
    %v536 = vshll.u32 %v527, %v534
    %v537 = vshrl.u32 %v519, %v535
    %v538 = vor.u32 %v536, %v537
    %v539 = vsub.s32 4294967266, %v534
    %v540 = vadd.s32 %v539, 127
    %v541 = vshll.u32 %v540, 23
    %v542 = vor.u32 4788187, %v541
    %v543 = vand.u32 2147483647, %v542
    %v545 = vcvt.s32.f32 %v538
    %v546 = vmul.f32 %v545, %v543
    %v547 = vxor.u32 %v546, 2147483648
    %v548 = vsel %vm465, %v547, %v546
    %v549 = vsub.s32 4, %v525
    %v550 = vsel %vm465, %v549, %v525
    %v551 = vsel %vm464, %v44, %v548
    %v552 = vsel %vm464, 0, %v550
    %v553 = vcosq.f32.pop %v551
    %v554 = vsinq.f32.pop %v551
    %vm555 = vweird.f32 %v44
    %v556 = vand.u32 %v552, 3
    %vm557 = vcmp.lt.s32.totalorder %v556, 2
    %vm558 = vcmp.eq.s32.totalorder %v556, 0
    %v559 = vxor.u32 %v554, 2147483648
    %v560 = vsel %vm558, %v553, %v559
    %vm561 = vcmp.eq.s32.totalorder %v556, 2
    %v562 = vxor.u32 %v553, 2147483648
    %v563 = vsel %vm561, %v562, %v554
    %v564 = vsel %vm557, %v560, %v563
    %v565 = vsel %vm555, nan, %v564
    %v566 = vand.u32 2147483647, %v45
    %vm567 = vcmp.le.f32.partialorder %v566, 0.7853982
    %vm568 = vcmp.lt.s32.totalorder %v45, 0
    %v569 = vand.u32 %v45, 2139095040
    %v570 = vshrl.u32 %v569, 23
    %v571 = vsub.s32 %v570, 127
    %v572 = vand.u32 2147483647, %v45
    %v573 = vand.u32 %v572, 8388607
    %v574 = vor.u32 %v573, 8388608
    %v575 = vsub.s32 0, %v574
    %v576 = vadd.s32 %v571, 1
    %vm577 = vcmp.gt.s32.totalorder %v576, 0
    %v578 = vsel %vm577, %v576, 0
    %v579 = vshrl.u32 %v578, 5
    %v580 = vand.u32 %v578, 31
    %v581 = vsub.s32 32, %v580
    %v582 = vshrl.u32 683565275, %v581
    %v583 = vshll.u32 683565275, %v580
    %v584 = vshrl.u32 2475754826, %v581
    %v585 = vor.u32 %v583, %v584
    %v586 = vshll.u32 2475754826, %v580
    %v587 = vshrl.u32 2131351028, %v581
    %v588 = vor.u32 %v586, %v587
    %v589 = vshll.u32 2131351028, %v580
    %v590 = vshrl.u32 2102212464, %v581
    %v591 = vor.u32 %v589, %v590
    %v592 = vshll.u32 2102212464, %v580
    %v593 = vshrl.u32 920167782, %v581
    %v594 = vor.u32 %v592, %v593
    %v595 = vshll.u32 920167782, %v580
    %v596 = vshrl.u32 1326507024, %v581
    %v597 = vor.u32 %v595, %v596
    %vm598 = vcmp.lt.s32.totalorder %v579, 1
    %vm599 = vcmp.lt.s32.totalorder %v579, 2
    %vm600 = vcmp.lt.s32.totalorder %v579, 3
    %vm601 = vcmp.lt.s32.totalorder %v579, 4
    %v602 = vsel %vm598, %v582, %v585
    %v603 = vsel %vm601, %v591, 2102212464
    %v604 = vsel %vm600, %v588, %v603
    %v605 = vsel %vm599, %v602, %v604
    %v606 = vsel %vm598, %v585, %v588
    %v607 = vsel %vm601, %v594, 920167782
    %v608 = vsel %vm600, %v591, %v607
    %v609 = vsel %vm599, %v606, %v608
    %v610 = vsel %vm598, %v588, %v591
    %v611 = vsel %vm601, %v597, 1326507024
    %v612 = vsel %vm600, %v594, %v611
    %v613 = vsel %vm599, %v610, %v612
    %v614 = vshll.u32 %v574, 8
    %v615 = vmul.u32.u64.compose %v614, %v613
    %v616 = vextract.low.u32 %v615
    %v617 = vextract.high.u32 %v615
    %v618 = vmul.u32.u64.compose %v614, %v609
    %v619 = vextract.low.u32 %v618
    %v620 = vextract.high.u32 %v618
    %v621 = vmul.u32 %v614, %v605
    %v622 = vadd.s32 %v617, %v619
    %vm623 = vc.u32 %v617, %v619
    %v624 = vadd.s32 %v620, 1
    %v625 = vsel %vm623, %v624, %v620
    %v626 = vadd.s32 %v621, %v625
    %v627 = vadd.s32 %v626, 536870912
    %v628 = vshrl.u32 %v627, 30
    %v629 = vshll.u32 %v628, 30
    %v630 = vsub.s32 %v626, %v629
    %vm631 = vcmp.lt.s32.totalorder %v630, 0
    %v632 = vsub.s32 0, %v630
    %v633 = vsel %vm631, %v632, %v630
    %v634 = vclz %v633
    %v635 = vsub.s32 %v634, 2
    %vm636 = vcmp.gt.s32.totalorder 0, %v635
    %v637 = vsel %vm636, 0, %v635
    %v638 = vsub.s32 32, %v637
    %v639 = vshll.u32 %v630, %v637
    %v640 = vshrl.u32 %v622, %v638
    %v641 = vor.u32 %v639, %v640
    %v642 = vsub.s32 4294967266, %v637
    %v643 = vadd.s32 %v642, 127
    %v644 = vshll.u32 %v643, 23
    %v645 = vor.u32 4788187, %v644
    %v646 = vand.u32 2147483647, %v645
    %v648 = vcvt.s32.f32 %v641
    %v649 = vmul.f32 %v648, %v646
    %v650 = vxor.u32 %v649, 2147483648
    %v651 = vsel %vm568, %v650, %v649
    %v652 = vsub.s32 4, %v628
    %v653 = vsel %vm568, %v652, %v628
    %v654 = vsel %vm567, %v45, %v651
    %v655 = vsel %vm567, 0, %v653
    %v656 = vcosq.f32.pop %v654
    %v657 = vsinq.f32.pop %v654
    %vm658 = vweird.f32 %v45
    %v659 = vand.u32 %v655, 3
    %vm660 = vcmp.lt.s32.totalorder %v659, 2
    %vm661 = vcmp.eq.s32.totalorder %v659, 0
    %v662 = vxor.u32 %v657, 2147483648
    %v663 = vsel %vm661, %v656, %v662
    %vm664 = vcmp.eq.s32.totalorder %v659, 2
    %v665 = vxor.u32 %v656, 2147483648
    %v666 = vsel %vm664, %v665, %v657
    %v667 = vsel %vm660, %v663, %v666
    %v668 = vsel %vm658, nan, %v667
    %v669 = vand.u32 2147483647, %v46
    %vm670 = vcmp.le.f32.partialorder %v669, 0.7853982
    %vm671 = vcmp.lt.s32.totalorder %v46, 0
    %v672 = vand.u32 %v46, 2139095040
    %v673 = vshrl.u32 %v672, 23
    %v674 = vsub.s32 %v673, 127
    %v675 = vand.u32 2147483647, %v46
    %v676 = vand.u32 %v675, 8388607
    %v677 = vor.u32 %v676, 8388608
    %v678 = vsub.s32 0, %v677
    %v679 = vadd.s32 %v674, 1
    %vm680 = vcmp.gt.s32.totalorder %v679, 0
    %v681 = vsel %vm680, %v679, 0
    %v682 = vshrl.u32 %v681, 5
    %v683 = vand.u32 %v681, 31
    %v684 = vsub.s32 32, %v683
    %v685 = vshrl.u32 683565275, %v684
    %v686 = vshll.u32 683565275, %v683
    %v687 = vshrl.u32 2475754826, %v684
    %v688 = vor.u32 %v686, %v687
    %v689 = vshll.u32 2475754826, %v683
    %v690 = vshrl.u32 2131351028, %v684
    %v691 = vor.u32 %v689, %v690
    %v692 = vshll.u32 2131351028, %v683
    %v693 = vshrl.u32 2102212464, %v684
    %v694 = vor.u32 %v692, %v693
    %v695 = vshll.u32 2102212464, %v683
    %v696 = vshrl.u32 920167782, %v684
    %v697 = vor.u32 %v695, %v696
    %v698 = vshll.u32 920167782, %v683
    %v699 = vshrl.u32 1326507024, %v684
    %v700 = vor.u32 %v698, %v699
    %vm701 = vcmp.lt.s32.totalorder %v682, 1
    %vm702 = vcmp.lt.s32.totalorder %v682, 2
    %vm703 = vcmp.lt.s32.totalorder %v682, 3
    %vm704 = vcmp.lt.s32.totalorder %v682, 4
    %v705 = vsel %vm701, %v685, %v688
    %v706 = vsel %vm704, %v694, 2102212464
    %v707 = vsel %vm703, %v691, %v706
    %v708 = vsel %vm702, %v705, %v707
    %v709 = vsel %vm701, %v688, %v691
    %v710 = vsel %vm704, %v697, 920167782
    %v711 = vsel %vm703, %v694, %v710
    %v712 = vsel %vm702, %v709, %v711
    %v713 = vsel %vm701, %v691, %v694
    %v714 = vsel %vm704, %v700, 1326507024
    %v715 = vsel %vm703, %v697, %v714
    %v716 = vsel %vm702, %v713, %v715
    %v717 = vshll.u32 %v677, 8
    %v718 = vmul.u32.u64.compose %v717, %v716
    %v719 = vextract.low.u32 %v718
    %v720 = vextract.high.u32 %v718
    %v721 = vmul.u32.u64.compose %v717, %v712
    %v722 = vextract.low.u32 %v721
    %v723 = vextract.high.u32 %v721
    %v724 = vmul.u32 %v717, %v708
    %v725 = vadd.s32 %v720, %v722
    %vm726 = vc.u32 %v720, %v722
    %v727 = vadd.s32 %v723, 1
    %v728 = vsel %vm726, %v727, %v723
    %v729 = vadd.s32 %v724, %v728
    %v730 = vadd.s32 %v729, 536870912
    %v731 = vshrl.u32 %v730, 30
    %v732 = vshll.u32 %v731, 30
    %v733 = vsub.s32 %v729, %v732
    %vm734 = vcmp.lt.s32.totalorder %v733, 0
    %v735 = vsub.s32 0, %v733
    %v736 = vsel %vm734, %v735, %v733
    %v737 = vclz %v736
    %v738 = vsub.s32 %v737, 2
    %vm739 = vcmp.gt.s32.totalorder 0, %v738
    %v740 = vsel %vm739, 0, %v738
    %v741 = vsub.s32 32, %v740
    %v742 = vshll.u32 %v733, %v740
    %v743 = vshrl.u32 %v725, %v741
    %v744 = vor.u32 %v742, %v743
    %v745 = vsub.s32 4294967266, %v740
    %v746 = vadd.s32 %v745, 127
    %v747 = vshll.u32 %v746, 23
    %v748 = vor.u32 4788187, %v747
    %v749 = vand.u32 2147483647, %v748
    %v751 = vcvt.s32.f32 %v744
    %v752 = vmul.f32 %v751, %v749
    %v753 = vxor.u32 %v752, 2147483648
    %v754 = vsel %vm671, %v753, %v752
    %v755 = vsub.s32 4, %v731
    %v756 = vsel %vm671, %v755, %v731
    %v757 = vsel %vm670, %v46, %v754
    %v758 = vsel %vm670, 0, %v756
    %v759 = vcosq.f32.pop %v757
    %v760 = vsinq.f32.pop %v757
    %vm761 = vweird.f32 %v46
    %v762 = vand.u32 %v758, 3
    %vm763 = vcmp.lt.s32.totalorder %v762, 2
    %vm764 = vcmp.eq.s32.totalorder %v762, 0
    %v765 = vxor.u32 %v760, 2147483648
    %v766 = vsel %vm764, %v759, %v765
    %vm767 = vcmp.eq.s32.totalorder %v762, 2
    %v768 = vxor.u32 %v759, 2147483648
    %v769 = vsel %vm767, %v768, %v760
    %v770 = vsel %vm763, %v766, %v769
    %v771 = vsel %vm761, nan, %v770
    %v772 = vand.u32 2147483647, %v47
    %vm773 = vcmp.le.f32.partialorder %v772, 0.7853982
    %vm774 = vcmp.lt.s32.totalorder %v47, 0
    %v775 = vand.u32 %v47, 2139095040
    %v776 = vshrl.u32 %v775, 23
    %v777 = vsub.s32 %v776, 127
    %v778 = vand.u32 2147483647, %v47
    %v779 = vand.u32 %v778, 8388607
    %v780 = vor.u32 %v779, 8388608
    %v781 = vsub.s32 0, %v780
    %v782 = vadd.s32 %v777, 1
    %vm783 = vcmp.gt.s32.totalorder %v782, 0
    %v784 = vsel %vm783, %v782, 0
    %v785 = vshrl.u32 %v784, 5
    %v786 = vand.u32 %v784, 31
    %v787 = vsub.s32 32, %v786
    %v788 = vshrl.u32 683565275, %v787
    %v789 = vshll.u32 683565275, %v786
    %v790 = vshrl.u32 2475754826, %v787
    %v791 = vor.u32 %v789, %v790
    %v792 = vshll.u32 2475754826, %v786
    %v793 = vshrl.u32 2131351028, %v787
    %v794 = vor.u32 %v792, %v793
    %v795 = vshll.u32 2131351028, %v786
    %v796 = vshrl.u32 2102212464, %v787
    %v797 = vor.u32 %v795, %v796
    %v798 = vshll.u32 2102212464, %v786
    %v799 = vshrl.u32 920167782, %v787
    %v800 = vor.u32 %v798, %v799
    %v801 = vshll.u32 920167782, %v786
    %v802 = vshrl.u32 1326507024, %v787
    %v803 = vor.u32 %v801, %v802
    %vm804 = vcmp.lt.s32.totalorder %v785, 1
    %vm805 = vcmp.lt.s32.totalorder %v785, 2
    %vm806 = vcmp.lt.s32.totalorder %v785, 3
    %vm807 = vcmp.lt.s32.totalorder %v785, 4
    %v808 = vsel %vm804, %v788, %v791
    %v809 = vsel %vm807, %v797, 2102212464
    %v810 = vsel %vm806, %v794, %v809
    %v811 = vsel %vm805, %v808, %v810
    %v812 = vsel %vm804, %v791, %v794
    %v813 = vsel %vm807, %v800, 920167782
    %v814 = vsel %vm806, %v797, %v813
    %v815 = vsel %vm805, %v812, %v814
    %v816 = vsel %vm804, %v794, %v797
    %v817 = vsel %vm807, %v803, 1326507024
    %v818 = vsel %vm806, %v800, %v817
    %v819 = vsel %vm805, %v816, %v818
    %v820 = vshll.u32 %v780, 8
    %v821 = vmul.u32.u64.compose %v820, %v819
    %v822 = vextract.low.u32 %v821
    %v823 = vextract.high.u32 %v821
    %v824 = vmul.u32.u64.compose %v820, %v815
    %v825 = vextract.low.u32 %v824
    %v826 = vextract.high.u32 %v824
    %v827 = vmul.u32 %v820, %v811
    %v828 = vadd.s32 %v823, %v825
    %vm829 = vc.u32 %v823, %v825
    %v830 = vadd.s32 %v826, 1
    %v831 = vsel %vm829, %v830, %v826
    %v832 = vadd.s32 %v827, %v831
    %v833 = vadd.s32 %v832, 536870912
    %v834 = vshrl.u32 %v833, 30
    %v835 = vshll.u32 %v834, 30
    %v836 = vsub.s32 %v832, %v835
    %vm837 = vcmp.lt.s32.totalorder %v836, 0
    %v838 = vsub.s32 0, %v836
    %v839 = vsel %vm837, %v838, %v836
    %v840 = vclz %v839
    %v841 = vsub.s32 %v840, 2
    %vm842 = vcmp.gt.s32.totalorder 0, %v841
    %v843 = vsel %vm842, 0, %v841
    %v844 = vsub.s32 32, %v843
    %v845 = vshll.u32 %v836, %v843
    %v846 = vshrl.u32 %v828, %v844
    %v847 = vor.u32 %v845, %v846
    %v848 = vsub.s32 4294967266, %v843
    %v849 = vadd.s32 %v848, 127
    %v850 = vshll.u32 %v849, 23
    %v851 = vor.u32 4788187, %v850
    %v852 = vand.u32 2147483647, %v851
    %v854 = vcvt.s32.f32 %v847
    %v855 = vmul.f32 %v854, %v852
    %v856 = vxor.u32 %v855, 2147483648
    %v857 = vsel %vm774, %v856, %v855
    %v858 = vsub.s32 4, %v834
    %v859 = vsel %vm774, %v858, %v834
    %v860 = vsel %vm773, %v47, %v857
    %v861 = vsel %vm773, 0, %v859
    %v862 = vcosq.f32.pop %v860
    %v863 = vsinq.f32.pop %v860
    %vm864 = vweird.f32 %v47
    %v865 = vand.u32 %v861, 3
    %vm866 = vcmp.lt.s32.totalorder %v865, 2
    %vm867 = vcmp.eq.s32.totalorder %v865, 0
    %v868 = vxor.u32 %v863, 2147483648
    %v869 = vsel %vm867, %v862, %v868
    %vm870 = vcmp.eq.s32.totalorder %v865, 2
    %v871 = vxor.u32 %v862, 2147483648
    %v872 = vsel %vm870, %v871, %v863
    %v873 = vsel %vm866, %v869, %v872
    %v874 = vsel %vm864, nan, %v873
    %v875 = vand.u32 2147483647, %v48
    %vm876 = vcmp.le.f32.partialorder %v875, 0.7853982
    %vm877 = vcmp.lt.s32.totalorder %v48, 0
    %v878 = vand.u32 %v48, 2139095040
    %v879 = vshrl.u32 %v878, 23
    %v880 = vsub.s32 %v879, 127
    %v881 = vand.u32 2147483647, %v48
    %v882 = vand.u32 %v881, 8388607
    %v883 = vor.u32 %v882, 8388608
    %v884 = vsub.s32 0, %v883
    %v885 = vadd.s32 %v880, 1
    %vm886 = vcmp.gt.s32.totalorder %v885, 0
    %v887 = vsel %vm886, %v885, 0
    %v888 = vshrl.u32 %v887, 5
    %v889 = vand.u32 %v887, 31
    %v890 = vsub.s32 32, %v889
    %v891 = vshrl.u32 683565275, %v890
    %v892 = vshll.u32 683565275, %v889
    %v893 = vshrl.u32 2475754826, %v890
    %v894 = vor.u32 %v892, %v893
    %v895 = vshll.u32 2475754826, %v889
    %v896 = vshrl.u32 2131351028, %v890
    %v897 = vor.u32 %v895, %v896
    %v898 = vshll.u32 2131351028, %v889
    %v899 = vshrl.u32 2102212464, %v890
    %v900 = vor.u32 %v898, %v899
    %v901 = vshll.u32 2102212464, %v889
    %v902 = vshrl.u32 920167782, %v890
    %v903 = vor.u32 %v901, %v902
    %v904 = vshll.u32 920167782, %v889
    %v905 = vshrl.u32 1326507024, %v890
    %v906 = vor.u32 %v904, %v905
    %vm907 = vcmp.lt.s32.totalorder %v888, 1
    %vm908 = vcmp.lt.s32.totalorder %v888, 2
    %vm909 = vcmp.lt.s32.totalorder %v888, 3
    %vm910 = vcmp.lt.s32.totalorder %v888, 4
    %v911 = vsel %vm907, %v891, %v894
    %v912 = vsel %vm910, %v900, 2102212464
    %v913 = vsel %vm909, %v897, %v912
    %v914 = vsel %vm908, %v911, %v913
    %v915 = vsel %vm907, %v894, %v897
    %v916 = vsel %vm910, %v903, 920167782
    %v917 = vsel %vm909, %v900, %v916
    %v918 = vsel %vm908, %v915, %v917
    %v919 = vsel %vm907, %v897, %v900
    %v920 = vsel %vm910, %v906, 1326507024
    %v921 = vsel %vm909, %v903, %v920
    %v922 = vsel %vm908, %v919, %v921
    %v923 = vshll.u32 %v883, 8
    %v924 = vmul.u32.u64.compose %v923, %v922
    %v925 = vextract.low.u32 %v924
    %v926 = vextract.high.u32 %v924
    %v927 = vmul.u32.u64.compose %v923, %v918
    %v928 = vextract.low.u32 %v927
    %v929 = vextract.high.u32 %v927
    %v930 = vmul.u32 %v923, %v914
    %v931 = vadd.s32 %v926, %v928
    %vm932 = vc.u32 %v926, %v928
    %v933 = vadd.s32 %v929, 1
    %v934 = vsel %vm932, %v933, %v929
    %v935 = vadd.s32 %v930, %v934
    %v936 = vadd.s32 %v935, 536870912
    %v937 = vshrl.u32 %v936, 30
    %v938 = vshll.u32 %v937, 30
    %v939 = vsub.s32 %v935, %v938
    %vm940 = vcmp.lt.s32.totalorder %v939, 0
    %v941 = vsub.s32 0, %v939
    %v942 = vsel %vm940, %v941, %v939
    %v943 = vclz %v942
    %v944 = vsub.s32 %v943, 2
    %vm945 = vcmp.gt.s32.totalorder 0, %v944
    %v946 = vsel %vm945, 0, %v944
    %v947 = vsub.s32 32, %v946
    %v948 = vshll.u32 %v939, %v946
    %v949 = vshrl.u32 %v931, %v947
    %v950 = vor.u32 %v948, %v949
    %v951 = vsub.s32 4294967266, %v946
    %v952 = vadd.s32 %v951, 127
    %v953 = vshll.u32 %v952, 23
    %v954 = vor.u32 4788187, %v953
    %v955 = vand.u32 2147483647, %v954
    %v957 = vcvt.s32.f32 %v950
    %v958 = vmul.f32 %v957, %v955
    %v959 = vxor.u32 %v958, 2147483648
    %v960 = vsel %vm877, %v959, %v958
    %v961 = vsub.s32 4, %v937
    %v962 = vsel %vm877, %v961, %v937
    %v963 = vsel %vm876, %v48, %v960
    %v964 = vsel %vm876, 0, %v962
    %v965 = vcosq.f32.pop %v963
    %v966 = vsinq.f32.pop %v963
    %vm967 = vweird.f32 %v48
    %v968 = vand.u32 %v964, 3
    %vm969 = vcmp.lt.s32.totalorder %v968, 2
    %vm970 = vcmp.eq.s32.totalorder %v968, 0
    %v971 = vxor.u32 %v966, 2147483648
    %v972 = vsel %vm970, %v965, %v971
    %vm973 = vcmp.eq.s32.totalorder %v968, 2
    %v974 = vxor.u32 %v965, 2147483648
    %v975 = vsel %vm973, %v974, %v966
    %v976 = vsel %vm969, %v972, %v975
    %v977 = vsel %vm967, nan, %v976
    %v978 = vand.u32 2147483647, %v49
    %vm979 = vcmp.le.f32.partialorder %v978, 0.7853982
    %vm980 = vcmp.lt.s32.totalorder %v49, 0
    %v981 = vand.u32 %v49, 2139095040
    %v982 = vshrl.u32 %v981, 23
    %v983 = vsub.s32 %v982, 127
    %v984 = vand.u32 2147483647, %v49
    %v985 = vand.u32 %v984, 8388607
    %v986 = vor.u32 %v985, 8388608
    %v987 = vsub.s32 0, %v986
    %v988 = vadd.s32 %v983, 1
    %vm989 = vcmp.gt.s32.totalorder %v988, 0
    %v990 = vsel %vm989, %v988, 0
    %v991 = vshrl.u32 %v990, 5
    %v992 = vand.u32 %v990, 31
    %v993 = vsub.s32 32, %v992
    %v994 = vshrl.u32 683565275, %v993
    %v995 = vshll.u32 683565275, %v992
    %v996 = vshrl.u32 2475754826, %v993
    %v997 = vor.u32 %v995, %v996
    %v998 = vshll.u32 2475754826, %v992
    %v999 = vshrl.u32 2131351028, %v993
    %v1000 = vor.u32 %v998, %v999
    %v1001 = vshll.u32 2131351028, %v992
    %v1002 = vshrl.u32 2102212464, %v993
    %v1003 = vor.u32 %v1001, %v1002
    %v1004 = vshll.u32 2102212464, %v992
    %v1005 = vshrl.u32 920167782, %v993
    %v1006 = vor.u32 %v1004, %v1005
    %v1007 = vshll.u32 920167782, %v992
    %v1008 = vshrl.u32 1326507024, %v993
    %v1009 = vor.u32 %v1007, %v1008
    %vm1010 = vcmp.lt.s32.totalorder %v991, 1
    %vm1011 = vcmp.lt.s32.totalorder %v991, 2
    %vm1012 = vcmp.lt.s32.totalorder %v991, 3
    %vm1013 = vcmp.lt.s32.totalorder %v991, 4
    %v1014 = vsel %vm1010, %v994, %v997
    %v1015 = vsel %vm1013, %v1003, 2102212464
    %v1016 = vsel %vm1012, %v1000, %v1015
    %v1017 = vsel %vm1011, %v1014, %v1016
    %v1018 = vsel %vm1010, %v997, %v1000
    %v1019 = vsel %vm1013, %v1006, 920167782
    %v1020 = vsel %vm1012, %v1003, %v1019
    %v1021 = vsel %vm1011, %v1018, %v1020
    %v1022 = vsel %vm1010, %v1000, %v1003
    %v1023 = vsel %vm1013, %v1009, 1326507024
    %v1024 = vsel %vm1012, %v1006, %v1023
    %v1025 = vsel %vm1011, %v1022, %v1024
    %v1026 = vshll.u32 %v986, 8
    %v1027 = vmul.u32.u64.compose %v1026, %v1025
    %v1028 = vextract.low.u32 %v1027
    %v1029 = vextract.high.u32 %v1027
    %v1030 = vmul.u32.u64.compose %v1026, %v1021
    %v1031 = vextract.low.u32 %v1030
    %v1032 = vextract.high.u32 %v1030
    %v1033 = vmul.u32 %v1026, %v1017
    %v1034 = vadd.s32 %v1029, %v1031
    %vm1035 = vc.u32 %v1029, %v1031
    %v1036 = vadd.s32 %v1032, 1
    %v1037 = vsel %vm1035, %v1036, %v1032
    %v1038 = vadd.s32 %v1033, %v1037
    %v1039 = vadd.s32 %v1038, 536870912
    %v1040 = vshrl.u32 %v1039, 30
    %v1041 = vshll.u32 %v1040, 30
    %v1042 = vsub.s32 %v1038, %v1041
    %vm1043 = vcmp.lt.s32.totalorder %v1042, 0
    %v1044 = vsub.s32 0, %v1042
    %v1045 = vsel %vm1043, %v1044, %v1042
    %v1046 = vclz %v1045
    %v1047 = vsub.s32 %v1046, 2
    %vm1048 = vcmp.gt.s32.totalorder 0, %v1047
    %v1049 = vsel %vm1048, 0, %v1047
    %v1050 = vsub.s32 32, %v1049
    %v1051 = vshll.u32 %v1042, %v1049
    %v1052 = vshrl.u32 %v1034, %v1050
    %v1053 = vor.u32 %v1051, %v1052
    %v1054 = vsub.s32 4294967266, %v1049
    %v1055 = vadd.s32 %v1054, 127
    %v1056 = vshll.u32 %v1055, 23
    %v1057 = vor.u32 4788187, %v1056
    %v1058 = vand.u32 2147483647, %v1057
    %v1060 = vcvt.s32.f32 %v1053
    %v1061 = vmul.f32 %v1060, %v1058
    %v1062 = vxor.u32 %v1061, 2147483648
    %v1063 = vsel %vm980, %v1062, %v1061
    %v1064 = vsub.s32 4, %v1040
    %v1065 = vsel %vm980, %v1064, %v1040
    %v1066 = vsel %vm979, %v49, %v1063
    %v1067 = vsel %vm979, 0, %v1065
    %v1068 = vcosq.f32.pop %v1066
    %v1069 = vsinq.f32.pop %v1066
    %vm1070 = vweird.f32 %v49
    %v1071 = vand.u32 %v1067, 3
    %vm1072 = vcmp.lt.s32.totalorder %v1071, 2
    %vm1073 = vcmp.eq.s32.totalorder %v1071, 0
    %v1074 = vxor.u32 %v1069, 2147483648
    %v1075 = vsel %vm1073, %v1068, %v1074
    %vm1076 = vcmp.eq.s32.totalorder %v1071, 2
    %v1077 = vxor.u32 %v1068, 2147483648
    %v1078 = vsel %vm1076, %v1077, %v1069
    %v1079 = vsel %vm1072, %v1075, %v1078
    %v1080 = vsel %vm1070, nan, %v1079
    %v1081 = vand.u32 2147483647, %v42
    %vm1082 = vcmp.le.f32.partialorder %v1081, 0.7853982
    %vm1083 = vcmp.lt.s32.totalorder %v42, 0
    %v1084 = vand.u32 %v42, 2139095040
    %v1085 = vshrl.u32 %v1084, 23
    %v1086 = vsub.s32 %v1085, 127
    %v1087 = vand.u32 2147483647, %v42
    %v1088 = vand.u32 %v1087, 8388607
    %v1089 = vor.u32 %v1088, 8388608
    %v1090 = vsub.s32 0, %v1089
    %v1091 = vadd.s32 %v1086, 1
    %vm1092 = vcmp.gt.s32.totalorder %v1091, 0
    %v1093 = vsel %vm1092, %v1091, 0
    %v1094 = vshrl.u32 %v1093, 5
    %v1095 = vand.u32 %v1093, 31
    %v1096 = vsub.s32 32, %v1095
    %v1097 = vshrl.u32 683565275, %v1096
    %v1098 = vshll.u32 683565275, %v1095
    %v1099 = vshrl.u32 2475754826, %v1096
    %v1100 = vor.u32 %v1098, %v1099
    %v1101 = vshll.u32 2475754826, %v1095
    %v1102 = vshrl.u32 2131351028, %v1096
    %v1103 = vor.u32 %v1101, %v1102
    %v1104 = vshll.u32 2131351028, %v1095
    %v1105 = vshrl.u32 2102212464, %v1096
    %v1106 = vor.u32 %v1104, %v1105
    %v1107 = vshll.u32 2102212464, %v1095
    %v1108 = vshrl.u32 920167782, %v1096
    %v1109 = vor.u32 %v1107, %v1108
    %v1110 = vshll.u32 920167782, %v1095
    %v1111 = vshrl.u32 1326507024, %v1096
    %v1112 = vor.u32 %v1110, %v1111
    %vm1113 = vcmp.lt.s32.totalorder %v1094, 1
    %vm1114 = vcmp.lt.s32.totalorder %v1094, 2
    %vm1115 = vcmp.lt.s32.totalorder %v1094, 3
    %vm1116 = vcmp.lt.s32.totalorder %v1094, 4
    %v1117 = vsel %vm1113, %v1097, %v1100
    %v1118 = vsel %vm1116, %v1106, 2102212464
    %v1119 = vsel %vm1115, %v1103, %v1118
    %v1120 = vsel %vm1114, %v1117, %v1119
    %v1121 = vsel %vm1113, %v1100, %v1103
    %v1122 = vsel %vm1116, %v1109, 920167782
    %v1123 = vsel %vm1115, %v1106, %v1122
    %v1124 = vsel %vm1114, %v1121, %v1123
    %v1125 = vsel %vm1113, %v1103, %v1106
    %v1126 = vsel %vm1116, %v1112, 1326507024
    %v1127 = vsel %vm1115, %v1109, %v1126
    %v1128 = vsel %vm1114, %v1125, %v1127
    %v1129 = vshll.u32 %v1089, 8
    %v1130 = vmul.u32.u64.compose %v1129, %v1128
    %v1131 = vextract.low.u32 %v1130
    %v1132 = vextract.high.u32 %v1130
    %v1133 = vmul.u32.u64.compose %v1129, %v1124
    %v1134 = vextract.low.u32 %v1133
    %v1135 = vextract.high.u32 %v1133
    %v1136 = vmul.u32 %v1129, %v1120
    %v1137 = vadd.s32 %v1132, %v1134
    %vm1138 = vc.u32 %v1132, %v1134
    %v1139 = vadd.s32 %v1135, 1
    %v1140 = vsel %vm1138, %v1139, %v1135
    %v1141 = vadd.s32 %v1136, %v1140
    %v1142 = vadd.s32 %v1141, 536870912
    %v1143 = vshrl.u32 %v1142, 30
    %v1144 = vshll.u32 %v1143, 30
    %v1145 = vsub.s32 %v1141, %v1144
    %vm1146 = vcmp.lt.s32.totalorder %v1145, 0
    %v1147 = vsub.s32 0, %v1145
    %v1148 = vsel %vm1146, %v1147, %v1145
    %v1149 = vclz %v1148
    %v1150 = vsub.s32 %v1149, 2
    %vm1151 = vcmp.gt.s32.totalorder 0, %v1150
    %v1152 = vsel %vm1151, 0, %v1150
    %v1153 = vsub.s32 32, %v1152
    %v1154 = vshll.u32 %v1145, %v1152
    %v1155 = vshrl.u32 %v1137, %v1153
    %v1156 = vor.u32 %v1154, %v1155
    %v1157 = vsub.s32 4294967266, %v1152
    %v1158 = vadd.s32 %v1157, 127
    %v1159 = vshll.u32 %v1158, 23
    %v1160 = vor.u32 4788187, %v1159
    %v1161 = vand.u32 2147483647, %v1160
    %v1163 = vcvt.s32.f32 %v1156
    %v1164 = vmul.f32 %v1163, %v1161
    %v1165 = vxor.u32 %v1164, 2147483648
    %v1166 = vsel %vm1083, %v1165, %v1164
    %v1167 = vsub.s32 4, %v1143
    %v1168 = vsel %vm1083, %v1167, %v1143
    %v1169 = vsel %vm1082, %v42, %v1166
    %v1170 = vsel %vm1082, 0, %v1168
    %v1171 = vcosq.f32.pop %v1169
    %v1172 = vsinq.f32.pop %v1169
    %vm1173 = vweird.f32 %v42
    %v1174 = vadd.s32 %v1170, 3
    %v1175 = vand.u32 %v1174, 3
    %vm1176 = vcmp.lt.s32.totalorder %v1175, 2
    %vm1177 = vcmp.eq.s32.totalorder %v1175, 0
    %v1178 = vxor.u32 %v1172, 2147483648
    %v1179 = vsel %vm1177, %v1171, %v1178
    %vm1180 = vcmp.eq.s32.totalorder %v1175, 2
    %v1181 = vxor.u32 %v1171, 2147483648
    %v1182 = vsel %vm1180, %v1181, %v1172
    %v1183 = vsel %vm1176, %v1179, %v1182
    %v1184 = vsel %vm1173, nan, %v1183
    %v1185 = vand.u32 2147483647, %v43
    %vm1186 = vcmp.le.f32.partialorder %v1185, 0.7853982
    %vm1187 = vcmp.lt.s32.totalorder %v43, 0
    %v1188 = vand.u32 %v43, 2139095040
    %v1189 = vshrl.u32 %v1188, 23
    %v1190 = vsub.s32 %v1189, 127
    %v1191 = vand.u32 2147483647, %v43
    %v1192 = vand.u32 %v1191, 8388607
    %v1193 = vor.u32 %v1192, 8388608
    %v1194 = vsub.s32 0, %v1193
    %v1195 = vadd.s32 %v1190, 1
    %vm1196 = vcmp.gt.s32.totalorder %v1195, 0
    %v1197 = vsel %vm1196, %v1195, 0
    %v1198 = vshrl.u32 %v1197, 5
    %v1199 = vand.u32 %v1197, 31
    %v1200 = vsub.s32 32, %v1199
    %v1201 = vshrl.u32 683565275, %v1200
    %v1202 = vshll.u32 683565275, %v1199
    %v1203 = vshrl.u32 2475754826, %v1200
    %v1204 = vor.u32 %v1202, %v1203
    %v1205 = vshll.u32 2475754826, %v1199
    %v1206 = vshrl.u32 2131351028, %v1200
    %v1207 = vor.u32 %v1205, %v1206
    %v1208 = vshll.u32 2131351028, %v1199
    %v1209 = vshrl.u32 2102212464, %v1200
    %v1210 = vor.u32 %v1208, %v1209
    %v1211 = vshll.u32 2102212464, %v1199
    %v1212 = vshrl.u32 920167782, %v1200
    %v1213 = vor.u32 %v1211, %v1212
    %v1214 = vshll.u32 920167782, %v1199
    %v1215 = vshrl.u32 1326507024, %v1200
    %v1216 = vor.u32 %v1214, %v1215
    %vm1217 = vcmp.lt.s32.totalorder %v1198, 1
    %vm1218 = vcmp.lt.s32.totalorder %v1198, 2
    %vm1219 = vcmp.lt.s32.totalorder %v1198, 3
    %vm1220 = vcmp.lt.s32.totalorder %v1198, 4
    %v1221 = vsel %vm1217, %v1201, %v1204
    %v1222 = vsel %vm1220, %v1210, 2102212464
    %v1223 = vsel %vm1219, %v1207, %v1222
    %v1224 = vsel %vm1218, %v1221, %v1223
    %v1225 = vsel %vm1217, %v1204, %v1207
    %v1226 = vsel %vm1220, %v1213, 920167782
    %v1227 = vsel %vm1219, %v1210, %v1226
    %v1228 = vsel %vm1218, %v1225, %v1227
    %v1229 = vsel %vm1217, %v1207, %v1210
    %v1230 = vsel %vm1220, %v1216, 1326507024
    %v1231 = vsel %vm1219, %v1213, %v1230
    %v1232 = vsel %vm1218, %v1229, %v1231
    %v1233 = vshll.u32 %v1193, 8
    %v1234 = vmul.u32.u64.compose %v1233, %v1232
    %v1235 = vextract.low.u32 %v1234
    %v1236 = vextract.high.u32 %v1234
    %v1237 = vmul.u32.u64.compose %v1233, %v1228
    %v1238 = vextract.low.u32 %v1237
    %v1239 = vextract.high.u32 %v1237
    %v1240 = vmul.u32 %v1233, %v1224
    %v1241 = vadd.s32 %v1236, %v1238
    %vm1242 = vc.u32 %v1236, %v1238
    %v1243 = vadd.s32 %v1239, 1
    %v1244 = vsel %vm1242, %v1243, %v1239
    %v1245 = vadd.s32 %v1240, %v1244
    %v1246 = vadd.s32 %v1245, 536870912
    %v1247 = vshrl.u32 %v1246, 30
    %v1248 = vshll.u32 %v1247, 30
    %v1249 = vsub.s32 %v1245, %v1248
    %vm1250 = vcmp.lt.s32.totalorder %v1249, 0
    %v1251 = vsub.s32 0, %v1249
    %v1252 = vsel %vm1250, %v1251, %v1249
    %v1253 = vclz %v1252
    %v1254 = vsub.s32 %v1253, 2
    %vm1255 = vcmp.gt.s32.totalorder 0, %v1254
    %v1256 = vsel %vm1255, 0, %v1254
    %v1257 = vsub.s32 32, %v1256
    %v1258 = vshll.u32 %v1249, %v1256
    %v1259 = vshrl.u32 %v1241, %v1257
    %v1260 = vor.u32 %v1258, %v1259
    %v1261 = vsub.s32 4294967266, %v1256
    %v1262 = vadd.s32 %v1261, 127
    %v1263 = vshll.u32 %v1262, 23
    %v1264 = vor.u32 4788187, %v1263
    %v1265 = vand.u32 2147483647, %v1264
    %v1267 = vcvt.s32.f32 %v1260
    %v1268 = vmul.f32 %v1267, %v1265
    %v1269 = vxor.u32 %v1268, 2147483648
    %v1270 = vsel %vm1187, %v1269, %v1268
    %v1271 = vsub.s32 4, %v1247
    %v1272 = vsel %vm1187, %v1271, %v1247
    %v1273 = vsel %vm1186, %v43, %v1270
    %v1274 = vsel %vm1186, 0, %v1272
    %v1275 = vcosq.f32.pop %v1273
    %v1276 = vsinq.f32.pop %v1273
    %vm1277 = vweird.f32 %v43
    %v1278 = vadd.s32 %v1274, 3
    %v1279 = vand.u32 %v1278, 3
    %vm1280 = vcmp.lt.s32.totalorder %v1279, 2
    %vm1281 = vcmp.eq.s32.totalorder %v1279, 0
    %v1282 = vxor.u32 %v1276, 2147483648
    %v1283 = vsel %vm1281, %v1275, %v1282
    %vm1284 = vcmp.eq.s32.totalorder %v1279, 2
    %v1285 = vxor.u32 %v1275, 2147483648
    %v1286 = vsel %vm1284, %v1285, %v1276
    %v1287 = vsel %vm1280, %v1283, %v1286
    %v1288 = vsel %vm1277, nan, %v1287
    %v1289 = vand.u32 2147483647, %v44
    %vm1290 = vcmp.le.f32.partialorder %v1289, 0.7853982
    %vm1291 = vcmp.lt.s32.totalorder %v44, 0
    %v1292 = vand.u32 %v44, 2139095040
    %v1293 = vshrl.u32 %v1292, 23
    %v1294 = vsub.s32 %v1293, 127
    %v1295 = vand.u32 2147483647, %v44
    %v1296 = vand.u32 %v1295, 8388607
    %v1297 = vor.u32 %v1296, 8388608
    %v1298 = vsub.s32 0, %v1297
    %v1299 = vadd.s32 %v1294, 1
    %vm1300 = vcmp.gt.s32.totalorder %v1299, 0
    %v1301 = vsel %vm1300, %v1299, 0
    %v1302 = vshrl.u32 %v1301, 5
    %v1303 = vand.u32 %v1301, 31
    %v1304 = vsub.s32 32, %v1303
    %v1305 = vshrl.u32 683565275, %v1304
    %v1306 = vshll.u32 683565275, %v1303
    %v1307 = vshrl.u32 2475754826, %v1304
    %v1308 = vor.u32 %v1306, %v1307
    %v1309 = vshll.u32 2475754826, %v1303
    %v1310 = vshrl.u32 2131351028, %v1304
    %v1311 = vor.u32 %v1309, %v1310
    %v1312 = vshll.u32 2131351028, %v1303
    %v1313 = vshrl.u32 2102212464, %v1304
    %v1314 = vor.u32 %v1312, %v1313
    %v1315 = vshll.u32 2102212464, %v1303
    %v1316 = vshrl.u32 920167782, %v1304
    %v1317 = vor.u32 %v1315, %v1316
    %v1318 = vshll.u32 920167782, %v1303
    %v1319 = vshrl.u32 1326507024, %v1304
    %v1320 = vor.u32 %v1318, %v1319
    %vm1321 = vcmp.lt.s32.totalorder %v1302, 1
    %vm1322 = vcmp.lt.s32.totalorder %v1302, 2
    %vm1323 = vcmp.lt.s32.totalorder %v1302, 3
    %vm1324 = vcmp.lt.s32.totalorder %v1302, 4
    %v1325 = vsel %vm1321, %v1305, %v1308
    %v1326 = vsel %vm1324, %v1314, 2102212464
    %v1327 = vsel %vm1323, %v1311, %v1326
    %v1328 = vsel %vm1322, %v1325, %v1327
    %v1329 = vsel %vm1321, %v1308, %v1311
    %v1330 = vsel %vm1324, %v1317, 920167782
    %v1331 = vsel %vm1323, %v1314, %v1330
    %v1332 = vsel %vm1322, %v1329, %v1331
    %v1333 = vsel %vm1321, %v1311, %v1314
    %v1334 = vsel %vm1324, %v1320, 1326507024
    %v1335 = vsel %vm1323, %v1317, %v1334
    %v1336 = vsel %vm1322, %v1333, %v1335
    %v1337 = vshll.u32 %v1297, 8
    %v1338 = vmul.u32.u64.compose %v1337, %v1336
    %v1339 = vextract.low.u32 %v1338
    %v1340 = vextract.high.u32 %v1338
    %v1341 = vmul.u32.u64.compose %v1337, %v1332
    %v1342 = vextract.low.u32 %v1341
    %v1343 = vextract.high.u32 %v1341
    %v1344 = vmul.u32 %v1337, %v1328
    %v1345 = vadd.s32 %v1340, %v1342
    %vm1346 = vc.u32 %v1340, %v1342
    %v1347 = vadd.s32 %v1343, 1
    %v1348 = vsel %vm1346, %v1347, %v1343
    %v1349 = vadd.s32 %v1344, %v1348
    %v1350 = vadd.s32 %v1349, 536870912
    %v1351 = vshrl.u32 %v1350, 30
    %v1352 = vshll.u32 %v1351, 30
    %v1353 = vsub.s32 %v1349, %v1352
    %vm1354 = vcmp.lt.s32.totalorder %v1353, 0
    %v1355 = vsub.s32 0, %v1353
    %v1356 = vsel %vm1354, %v1355, %v1353
    %v1357 = vclz %v1356
    %v1358 = vsub.s32 %v1357, 2
    %vm1359 = vcmp.gt.s32.totalorder 0, %v1358
    %v1360 = vsel %vm1359, 0, %v1358
    %v1361 = vsub.s32 32, %v1360
    %v1362 = vshll.u32 %v1353, %v1360
    %v1363 = vshrl.u32 %v1345, %v1361
    %v1364 = vor.u32 %v1362, %v1363
    %v1365 = vsub.s32 4294967266, %v1360
    %v1366 = vadd.s32 %v1365, 127
    %v1367 = vshll.u32 %v1366, 23
    %v1368 = vor.u32 4788187, %v1367
    %v1369 = vand.u32 2147483647, %v1368
    %v1371 = vcvt.s32.f32 %v1364
    %v1372 = vmul.f32 %v1371, %v1369
    %v1373 = vxor.u32 %v1372, 2147483648
    %v1374 = vsel %vm1291, %v1373, %v1372
    %v1375 = vsub.s32 4, %v1351
    %v1376 = vsel %vm1291, %v1375, %v1351
    %v1377 = vsel %vm1290, %v44, %v1374
    %v1378 = vsel %vm1290, 0, %v1376
    %v1379 = vcosq.f32.pop %v1377
    %v1380 = vsinq.f32.pop %v1377
    %vm1381 = vweird.f32 %v44
    %v1382 = vadd.s32 %v1378, 3
    %v1383 = vand.u32 %v1382, 3
    %vm1384 = vcmp.lt.s32.totalorder %v1383, 2
    %vm1385 = vcmp.eq.s32.totalorder %v1383, 0
    %v1386 = vxor.u32 %v1380, 2147483648
    %v1387 = vsel %vm1385, %v1379, %v1386
    %vm1388 = vcmp.eq.s32.totalorder %v1383, 2
    %v1389 = vxor.u32 %v1379, 2147483648
    %v1390 = vsel %vm1388, %v1389, %v1380
    %v1391 = vsel %vm1384, %v1387, %v1390
    %v1392 = vsel %vm1381, nan, %v1391
    %v1393 = vand.u32 2147483647, %v45
    %vm1394 = vcmp.le.f32.partialorder %v1393, 0.7853982
    %vm1395 = vcmp.lt.s32.totalorder %v45, 0
    %v1396 = vand.u32 %v45, 2139095040
    %v1397 = vshrl.u32 %v1396, 23
    %v1398 = vsub.s32 %v1397, 127
    %v1399 = vand.u32 2147483647, %v45
    %v1400 = vand.u32 %v1399, 8388607
    %v1401 = vor.u32 %v1400, 8388608
    %v1402 = vsub.s32 0, %v1401
    %v1403 = vadd.s32 %v1398, 1
    %vm1404 = vcmp.gt.s32.totalorder %v1403, 0
    %v1405 = vsel %vm1404, %v1403, 0
    %v1406 = vshrl.u32 %v1405, 5
    %v1407 = vand.u32 %v1405, 31
    %v1408 = vsub.s32 32, %v1407
    %v1409 = vshrl.u32 683565275, %v1408
    %v1410 = vshll.u32 683565275, %v1407
    %v1411 = vshrl.u32 2475754826, %v1408
    %v1412 = vor.u32 %v1410, %v1411
    %v1413 = vshll.u32 2475754826, %v1407
    %v1414 = vshrl.u32 2131351028, %v1408
    %v1415 = vor.u32 %v1413, %v1414
    %v1416 = vshll.u32 2131351028, %v1407
    %v1417 = vshrl.u32 2102212464, %v1408
    %v1418 = vor.u32 %v1416, %v1417
    %v1419 = vshll.u32 2102212464, %v1407
    %v1420 = vshrl.u32 920167782, %v1408
    %v1421 = vor.u32 %v1419, %v1420
    %v1422 = vshll.u32 920167782, %v1407
    %v1423 = vshrl.u32 1326507024, %v1408
    %v1424 = vor.u32 %v1422, %v1423
    %vm1425 = vcmp.lt.s32.totalorder %v1406, 1
    %vm1426 = vcmp.lt.s32.totalorder %v1406, 2
    %vm1427 = vcmp.lt.s32.totalorder %v1406, 3
    %vm1428 = vcmp.lt.s32.totalorder %v1406, 4
    %v1429 = vsel %vm1425, %v1409, %v1412
    %v1430 = vsel %vm1428, %v1418, 2102212464
    %v1431 = vsel %vm1427, %v1415, %v1430
    %v1432 = vsel %vm1426, %v1429, %v1431
    %v1433 = vsel %vm1425, %v1412, %v1415
    %v1434 = vsel %vm1428, %v1421, 920167782
    %v1435 = vsel %vm1427, %v1418, %v1434
    %v1436 = vsel %vm1426, %v1433, %v1435
    %v1437 = vsel %vm1425, %v1415, %v1418
    %v1438 = vsel %vm1428, %v1424, 1326507024
    %v1439 = vsel %vm1427, %v1421, %v1438
    %v1440 = vsel %vm1426, %v1437, %v1439
    %v1441 = vshll.u32 %v1401, 8
    %v1442 = vmul.u32.u64.compose %v1441, %v1440
    %v1443 = vextract.low.u32 %v1442
    %v1444 = vextract.high.u32 %v1442
    %v1445 = vmul.u32.u64.compose %v1441, %v1436
    %v1446 = vextract.low.u32 %v1445
    %v1447 = vextract.high.u32 %v1445
    %v1448 = vmul.u32 %v1441, %v1432
    %v1449 = vadd.s32 %v1444, %v1446
    %vm1450 = vc.u32 %v1444, %v1446
    %v1451 = vadd.s32 %v1447, 1
    %v1452 = vsel %vm1450, %v1451, %v1447
    %v1453 = vadd.s32 %v1448, %v1452
    %v1454 = vadd.s32 %v1453, 536870912
    %v1455 = vshrl.u32 %v1454, 30
    %v1456 = vshll.u32 %v1455, 30
    %v1457 = vsub.s32 %v1453, %v1456
    %vm1458 = vcmp.lt.s32.totalorder %v1457, 0
    %v1459 = vsub.s32 0, %v1457
    %v1460 = vsel %vm1458, %v1459, %v1457
    %v1461 = vclz %v1460
    %v1462 = vsub.s32 %v1461, 2
    %vm1463 = vcmp.gt.s32.totalorder 0, %v1462
    %v1464 = vsel %vm1463, 0, %v1462
    %v1465 = vsub.s32 32, %v1464
    %v1466 = vshll.u32 %v1457, %v1464
    %v1467 = vshrl.u32 %v1449, %v1465
    %v1468 = vor.u32 %v1466, %v1467
    %v1469 = vsub.s32 4294967266, %v1464
    %v1470 = vadd.s32 %v1469, 127
    %v1471 = vshll.u32 %v1470, 23
    %v1472 = vor.u32 4788187, %v1471
    %v1473 = vand.u32 2147483647, %v1472
    %v1475 = vcvt.s32.f32 %v1468
    %v1476 = vmul.f32 %v1475, %v1473
    %v1477 = vxor.u32 %v1476, 2147483648
    %v1478 = vsel %vm1395, %v1477, %v1476
    %v1479 = vsub.s32 4, %v1455
    %v1480 = vsel %vm1395, %v1479, %v1455
    %v1481 = vsel %vm1394, %v45, %v1478
    %v1482 = vsel %vm1394, 0, %v1480
    %v1483 = vcosq.f32.pop %v1481
    %v1484 = vsinq.f32.pop %v1481
    %vm1485 = vweird.f32 %v45
    %v1486 = vadd.s32 %v1482, 3
    %v1487 = vand.u32 %v1486, 3
    %vm1488 = vcmp.lt.s32.totalorder %v1487, 2
    %vm1489 = vcmp.eq.s32.totalorder %v1487, 0
    %v1490 = vxor.u32 %v1484, 2147483648
    %v1491 = vsel %vm1489, %v1483, %v1490
    %vm1492 = vcmp.eq.s32.totalorder %v1487, 2
    %v1493 = vxor.u32 %v1483, 2147483648
    %v1494 = vsel %vm1492, %v1493, %v1484
    %v1495 = vsel %vm1488, %v1491, %v1494
    %v1496 = vsel %vm1485, nan, %v1495
    %v1497 = vand.u32 2147483647, %v46
    %vm1498 = vcmp.le.f32.partialorder %v1497, 0.7853982
    %vm1499 = vcmp.lt.s32.totalorder %v46, 0
    %v1500 = vand.u32 %v46, 2139095040
    %v1501 = vshrl.u32 %v1500, 23
    %v1502 = vsub.s32 %v1501, 127
    %v1503 = vand.u32 2147483647, %v46
    %v1504 = vand.u32 %v1503, 8388607
    %v1505 = vor.u32 %v1504, 8388608
    %v1506 = vsub.s32 0, %v1505
    %v1507 = vadd.s32 %v1502, 1
    %vm1508 = vcmp.gt.s32.totalorder %v1507, 0
    %v1509 = vsel %vm1508, %v1507, 0
    %v1510 = vshrl.u32 %v1509, 5
    %v1511 = vand.u32 %v1509, 31
    %v1512 = vsub.s32 32, %v1511
    %v1513 = vshrl.u32 683565275, %v1512
    %v1514 = vshll.u32 683565275, %v1511
    %v1515 = vshrl.u32 2475754826, %v1512
    %v1516 = vor.u32 %v1514, %v1515
    %v1517 = vshll.u32 2475754826, %v1511
    %v1518 = vshrl.u32 2131351028, %v1512
    %v1519 = vor.u32 %v1517, %v1518
    %v1520 = vshll.u32 2131351028, %v1511
    %v1521 = vshrl.u32 2102212464, %v1512
    %v1522 = vor.u32 %v1520, %v1521
    %v1523 = vshll.u32 2102212464, %v1511
    %v1524 = vshrl.u32 920167782, %v1512
    %v1525 = vor.u32 %v1523, %v1524
    %v1526 = vshll.u32 920167782, %v1511
    %v1527 = vshrl.u32 1326507024, %v1512
    %v1528 = vor.u32 %v1526, %v1527
    %vm1529 = vcmp.lt.s32.totalorder %v1510, 1
    %vm1530 = vcmp.lt.s32.totalorder %v1510, 2
    %vm1531 = vcmp.lt.s32.totalorder %v1510, 3
    %vm1532 = vcmp.lt.s32.totalorder %v1510, 4
    %v1533 = vsel %vm1529, %v1513, %v1516
    %v1534 = vsel %vm1532, %v1522, 2102212464
    %v1535 = vsel %vm1531, %v1519, %v1534
    %v1536 = vsel %vm1530, %v1533, %v1535
    %v1537 = vsel %vm1529, %v1516, %v1519
    %v1538 = vsel %vm1532, %v1525, 920167782
    %v1539 = vsel %vm1531, %v1522, %v1538
    %v1540 = vsel %vm1530, %v1537, %v1539
    %v1541 = vsel %vm1529, %v1519, %v1522
    %v1542 = vsel %vm1532, %v1528, 1326507024
    %v1543 = vsel %vm1531, %v1525, %v1542
    %v1544 = vsel %vm1530, %v1541, %v1543
    %v1545 = vshll.u32 %v1505, 8
    %v1546 = vmul.u32.u64.compose %v1545, %v1544
    %v1547 = vextract.low.u32 %v1546
    %v1548 = vextract.high.u32 %v1546
    %v1549 = vmul.u32.u64.compose %v1545, %v1540
    %v1550 = vextract.low.u32 %v1549
    %v1551 = vextract.high.u32 %v1549
    %v1552 = vmul.u32 %v1545, %v1536
    %v1553 = vadd.s32 %v1548, %v1550
    %vm1554 = vc.u32 %v1548, %v1550
    %v1555 = vadd.s32 %v1551, 1
    %v1556 = vsel %vm1554, %v1555, %v1551
    %v1557 = vadd.s32 %v1552, %v1556
    %v1558 = vadd.s32 %v1557, 536870912
    %v1559 = vshrl.u32 %v1558, 30
    %v1560 = vshll.u32 %v1559, 30
    %v1561 = vsub.s32 %v1557, %v1560
    %vm1562 = vcmp.lt.s32.totalorder %v1561, 0
    %v1563 = vsub.s32 0, %v1561
    %v1564 = vsel %vm1562, %v1563, %v1561
    %v1565 = vclz %v1564
    %v1566 = vsub.s32 %v1565, 2
    %vm1567 = vcmp.gt.s32.totalorder 0, %v1566
    %v1568 = vsel %vm1567, 0, %v1566
    %v1569 = vsub.s32 32, %v1568
    %v1570 = vshll.u32 %v1561, %v1568
    %v1571 = vshrl.u32 %v1553, %v1569
    %v1572 = vor.u32 %v1570, %v1571
    %v1573 = vsub.s32 4294967266, %v1568
    %v1574 = vadd.s32 %v1573, 127
    %v1575 = vshll.u32 %v1574, 23
    %v1576 = vor.u32 4788187, %v1575
    %v1577 = vand.u32 2147483647, %v1576
    %v1579 = vcvt.s32.f32 %v1572
    %v1580 = vmul.f32 %v1579, %v1577
    %v1581 = vxor.u32 %v1580, 2147483648
    %v1582 = vsel %vm1499, %v1581, %v1580
    %v1583 = vsub.s32 4, %v1559
    %v1584 = vsel %vm1499, %v1583, %v1559
    %v1585 = vsel %vm1498, %v46, %v1582
    %v1586 = vsel %vm1498, 0, %v1584
    %v1587 = vcosq.f32.pop %v1585
    %v1588 = vsinq.f32.pop %v1585
    %vm1589 = vweird.f32 %v46
    %v1590 = vadd.s32 %v1586, 3
    %v1591 = vand.u32 %v1590, 3
    %vm1592 = vcmp.lt.s32.totalorder %v1591, 2
    %vm1593 = vcmp.eq.s32.totalorder %v1591, 0
    %v1594 = vxor.u32 %v1588, 2147483648
    %v1595 = vsel %vm1593, %v1587, %v1594
    %vm1596 = vcmp.eq.s32.totalorder %v1591, 2
    %v1597 = vxor.u32 %v1587, 2147483648
    %v1598 = vsel %vm1596, %v1597, %v1588
    %v1599 = vsel %vm1592, %v1595, %v1598
    %v1600 = vsel %vm1589, nan, %v1599
    %v1601 = vand.u32 2147483647, %v47
    %vm1602 = vcmp.le.f32.partialorder %v1601, 0.7853982
    %vm1603 = vcmp.lt.s32.totalorder %v47, 0
    %v1604 = vand.u32 %v47, 2139095040
    %v1605 = vshrl.u32 %v1604, 23
    %v1606 = vsub.s32 %v1605, 127
    %v1607 = vand.u32 2147483647, %v47
    %v1608 = vand.u32 %v1607, 8388607
    %v1609 = vor.u32 %v1608, 8388608
    %v1610 = vsub.s32 0, %v1609
    %v1611 = vadd.s32 %v1606, 1
    %vm1612 = vcmp.gt.s32.totalorder %v1611, 0
    %v1613 = vsel %vm1612, %v1611, 0
    %v1614 = vshrl.u32 %v1613, 5
    %v1615 = vand.u32 %v1613, 31
    %v1616 = vsub.s32 32, %v1615
    %v1617 = vshrl.u32 683565275, %v1616
    %v1618 = vshll.u32 683565275, %v1615
    %v1619 = vshrl.u32 2475754826, %v1616
    %v1620 = vor.u32 %v1618, %v1619
    %v1621 = vshll.u32 2475754826, %v1615
    %v1622 = vshrl.u32 2131351028, %v1616
    %v1623 = vor.u32 %v1621, %v1622
    %v1624 = vshll.u32 2131351028, %v1615
    %v1625 = vshrl.u32 2102212464, %v1616
    %v1626 = vor.u32 %v1624, %v1625
    %v1627 = vshll.u32 2102212464, %v1615
    %v1628 = vshrl.u32 920167782, %v1616
    %v1629 = vor.u32 %v1627, %v1628
    %v1630 = vshll.u32 920167782, %v1615
    %v1631 = vshrl.u32 1326507024, %v1616
    %v1632 = vor.u32 %v1630, %v1631
    %vm1633 = vcmp.lt.s32.totalorder %v1614, 1
    %vm1634 = vcmp.lt.s32.totalorder %v1614, 2
    %vm1635 = vcmp.lt.s32.totalorder %v1614, 3
    %vm1636 = vcmp.lt.s32.totalorder %v1614, 4
    %v1637 = vsel %vm1633, %v1617, %v1620
    %v1638 = vsel %vm1636, %v1626, 2102212464
    %v1639 = vsel %vm1635, %v1623, %v1638
    %v1640 = vsel %vm1634, %v1637, %v1639
    %v1641 = vsel %vm1633, %v1620, %v1623
    %v1642 = vsel %vm1636, %v1629, 920167782
    %v1643 = vsel %vm1635, %v1626, %v1642
    %v1644 = vsel %vm1634, %v1641, %v1643
    %v1645 = vsel %vm1633, %v1623, %v1626
    %v1646 = vsel %vm1636, %v1632, 1326507024
    %v1647 = vsel %vm1635, %v1629, %v1646
    %v1648 = vsel %vm1634, %v1645, %v1647
    %v1649 = vshll.u32 %v1609, 8
    %v1650 = vmul.u32.u64.compose %v1649, %v1648
    %v1651 = vextract.low.u32 %v1650
    %v1652 = vextract.high.u32 %v1650
    %v1653 = vmul.u32.u64.compose %v1649, %v1644
    %v1654 = vextract.low.u32 %v1653
    %v1655 = vextract.high.u32 %v1653
    %v1656 = vmul.u32 %v1649, %v1640
    %v1657 = vadd.s32 %v1652, %v1654
    %vm1658 = vc.u32 %v1652, %v1654
    %v1659 = vadd.s32 %v1655, 1
    %v1660 = vsel %vm1658, %v1659, %v1655
    %v1661 = vadd.s32 %v1656, %v1660
    %v1662 = vadd.s32 %v1661, 536870912
    %v1663 = vshrl.u32 %v1662, 30
    %v1664 = vshll.u32 %v1663, 30
    %v1665 = vsub.s32 %v1661, %v1664
    %vm1666 = vcmp.lt.s32.totalorder %v1665, 0
    %v1667 = vsub.s32 0, %v1665
    %v1668 = vsel %vm1666, %v1667, %v1665
    %v1669 = vclz %v1668
    %v1670 = vsub.s32 %v1669, 2
    %vm1671 = vcmp.gt.s32.totalorder 0, %v1670
    %v1672 = vsel %vm1671, 0, %v1670
    %v1673 = vsub.s32 32, %v1672
    %v1674 = vshll.u32 %v1665, %v1672
    %v1675 = vshrl.u32 %v1657, %v1673
    %v1676 = vor.u32 %v1674, %v1675
    %v1677 = vsub.s32 4294967266, %v1672
    %v1678 = vadd.s32 %v1677, 127
    %v1679 = vshll.u32 %v1678, 23
    %v1680 = vor.u32 4788187, %v1679
    %v1681 = vand.u32 2147483647, %v1680
    %v1683 = vcvt.s32.f32 %v1676
    %v1684 = vmul.f32 %v1683, %v1681
    %v1685 = vxor.u32 %v1684, 2147483648
    %v1686 = vsel %vm1603, %v1685, %v1684
    %v1687 = vsub.s32 4, %v1663
    %v1688 = vsel %vm1603, %v1687, %v1663
    %v1689 = vsel %vm1602, %v47, %v1686
    %v1690 = vsel %vm1602, 0, %v1688
    %v1691 = vcosq.f32.pop %v1689
    %v1692 = vsinq.f32.pop %v1689
    %vm1693 = vweird.f32 %v47
    %v1694 = vadd.s32 %v1690, 3
    %v1695 = vand.u32 %v1694, 3
    %vm1696 = vcmp.lt.s32.totalorder %v1695, 2
    %vm1697 = vcmp.eq.s32.totalorder %v1695, 0
    %v1698 = vxor.u32 %v1692, 2147483648
    %v1699 = vsel %vm1697, %v1691, %v1698
    %vm1700 = vcmp.eq.s32.totalorder %v1695, 2
    %v1701 = vxor.u32 %v1691, 2147483648
    %v1702 = vsel %vm1700, %v1701, %v1692
    %v1703 = vsel %vm1696, %v1699, %v1702
    %v1704 = vsel %vm1693, nan, %v1703
    %v1705 = vand.u32 2147483647, %v48
    %vm1706 = vcmp.le.f32.partialorder %v1705, 0.7853982
    %vm1707 = vcmp.lt.s32.totalorder %v48, 0
    %v1708 = vand.u32 %v48, 2139095040
    %v1709 = vshrl.u32 %v1708, 23
    %v1710 = vsub.s32 %v1709, 127
    %v1711 = vand.u32 2147483647, %v48
    %v1712 = vand.u32 %v1711, 8388607
    %v1713 = vor.u32 %v1712, 8388608
    %v1714 = vsub.s32 0, %v1713
    %v1715 = vadd.s32 %v1710, 1
    %vm1716 = vcmp.gt.s32.totalorder %v1715, 0
    %v1717 = vsel %vm1716, %v1715, 0
    %v1718 = vshrl.u32 %v1717, 5
    %v1719 = vand.u32 %v1717, 31
    %v1720 = vsub.s32 32, %v1719
    %v1721 = vshrl.u32 683565275, %v1720
    %v1722 = vshll.u32 683565275, %v1719
    %v1723 = vshrl.u32 2475754826, %v1720
    %v1724 = vor.u32 %v1722, %v1723
    %v1725 = vshll.u32 2475754826, %v1719
    %v1726 = vshrl.u32 2131351028, %v1720
    %v1727 = vor.u32 %v1725, %v1726
    %v1728 = vshll.u32 2131351028, %v1719
    %v1729 = vshrl.u32 2102212464, %v1720
    %v1730 = vor.u32 %v1728, %v1729
    %v1731 = vshll.u32 2102212464, %v1719
    %v1732 = vshrl.u32 920167782, %v1720
    %v1733 = vor.u32 %v1731, %v1732
    %v1734 = vshll.u32 920167782, %v1719
    %v1735 = vshrl.u32 1326507024, %v1720
    %v1736 = vor.u32 %v1734, %v1735
    %vm1737 = vcmp.lt.s32.totalorder %v1718, 1
    %vm1738 = vcmp.lt.s32.totalorder %v1718, 2
    %vm1739 = vcmp.lt.s32.totalorder %v1718, 3
    %vm1740 = vcmp.lt.s32.totalorder %v1718, 4
    %v1741 = vsel %vm1737, %v1721, %v1724
    %v1742 = vsel %vm1740, %v1730, 2102212464
    %v1743 = vsel %vm1739, %v1727, %v1742
    %v1744 = vsel %vm1738, %v1741, %v1743
    %v1745 = vsel %vm1737, %v1724, %v1727
    %v1746 = vsel %vm1740, %v1733, 920167782
    %v1747 = vsel %vm1739, %v1730, %v1746
    %v1748 = vsel %vm1738, %v1745, %v1747
    %v1749 = vsel %vm1737, %v1727, %v1730
    %v1750 = vsel %vm1740, %v1736, 1326507024
    %v1751 = vsel %vm1739, %v1733, %v1750
    %v1752 = vsel %vm1738, %v1749, %v1751
    %v1753 = vshll.u32 %v1713, 8
    %v1754 = vmul.u32.u64.compose %v1753, %v1752
    %v1755 = vextract.low.u32 %v1754
    %v1756 = vextract.high.u32 %v1754
    %v1757 = vmul.u32.u64.compose %v1753, %v1748
    %v1758 = vextract.low.u32 %v1757
    %v1759 = vextract.high.u32 %v1757
    %v1760 = vmul.u32 %v1753, %v1744
    %v1761 = vadd.s32 %v1756, %v1758
    %vm1762 = vc.u32 %v1756, %v1758
    %v1763 = vadd.s32 %v1759, 1
    %v1764 = vsel %vm1762, %v1763, %v1759
    %v1765 = vadd.s32 %v1760, %v1764
    %v1766 = vadd.s32 %v1765, 536870912
    %v1767 = vshrl.u32 %v1766, 30
    %v1768 = vshll.u32 %v1767, 30
    %v1769 = vsub.s32 %v1765, %v1768
    %vm1770 = vcmp.lt.s32.totalorder %v1769, 0
    %v1771 = vsub.s32 0, %v1769
    %v1772 = vsel %vm1770, %v1771, %v1769
    %v1773 = vclz %v1772
    %v1774 = vsub.s32 %v1773, 2
    %vm1775 = vcmp.gt.s32.totalorder 0, %v1774
    %v1776 = vsel %vm1775, 0, %v1774
    %v1777 = vsub.s32 32, %v1776
    %v1778 = vshll.u32 %v1769, %v1776
    %v1779 = vshrl.u32 %v1761, %v1777
    %v1780 = vor.u32 %v1778, %v1779
    %v1781 = vsub.s32 4294967266, %v1776
    %v1782 = vadd.s32 %v1781, 127
    %v1783 = vshll.u32 %v1782, 23
    %v1784 = vor.u32 4788187, %v1783
    %v1785 = vand.u32 2147483647, %v1784
    %v1787 = vcvt.s32.f32 %v1780
    %v1788 = vmul.f32 %v1787, %v1785
    %v1789 = vxor.u32 %v1788, 2147483648
    %v1790 = vsel %vm1707, %v1789, %v1788
    %v1791 = vsub.s32 4, %v1767
    %v1792 = vsel %vm1707, %v1791, %v1767
    %v1793 = vsel %vm1706, %v48, %v1790
    %v1794 = vsel %vm1706, 0, %v1792
    %v1795 = vcosq.f32.pop %v1793
    %v1796 = vsinq.f32.pop %v1793
    %vm1797 = vweird.f32 %v48
    %v1798 = vadd.s32 %v1794, 3
    %v1799 = vand.u32 %v1798, 3
    %vm1800 = vcmp.lt.s32.totalorder %v1799, 2
    %vm1801 = vcmp.eq.s32.totalorder %v1799, 0
    %v1802 = vxor.u32 %v1796, 2147483648
    %v1803 = vsel %vm1801, %v1795, %v1802
    %vm1804 = vcmp.eq.s32.totalorder %v1799, 2
    %v1805 = vxor.u32 %v1795, 2147483648
    %v1806 = vsel %vm1804, %v1805, %v1796
    %v1807 = vsel %vm1800, %v1803, %v1806
    %v1808 = vsel %vm1797, nan, %v1807
    %v1809 = vand.u32 2147483647, %v49
    %vm1810 = vcmp.le.f32.partialorder %v1809, 0.7853982
    %vm1811 = vcmp.lt.s32.totalorder %v49, 0
    %v1812 = vand.u32 %v49, 2139095040
    %v1813 = vshrl.u32 %v1812, 23
    %v1814 = vsub.s32 %v1813, 127
    %v1815 = vand.u32 2147483647, %v49
    %v1816 = vand.u32 %v1815, 8388607
    %v1817 = vor.u32 %v1816, 8388608
    %v1818 = vsub.s32 0, %v1817
    %v1819 = vadd.s32 %v1814, 1
    %vm1820 = vcmp.gt.s32.totalorder %v1819, 0
    %v1821 = vsel %vm1820, %v1819, 0
    %v1822 = vshrl.u32 %v1821, 5
    %v1823 = vand.u32 %v1821, 31
    %v1824 = vsub.s32 32, %v1823
    %v1825 = vshrl.u32 683565275, %v1824
    %v1826 = vshll.u32 683565275, %v1823
    %v1827 = vshrl.u32 2475754826, %v1824
    %v1828 = vor.u32 %v1826, %v1827
    %v1829 = vshll.u32 2475754826, %v1823
    %v1830 = vshrl.u32 2131351028, %v1824
    %v1831 = vor.u32 %v1829, %v1830
    %v1832 = vshll.u32 2131351028, %v1823
    %v1833 = vshrl.u32 2102212464, %v1824
    %v1834 = vor.u32 %v1832, %v1833
    %v1835 = vshll.u32 2102212464, %v1823
    %v1836 = vshrl.u32 920167782, %v1824
    %v1837 = vor.u32 %v1835, %v1836
    %v1838 = vshll.u32 920167782, %v1823
    %v1839 = vshrl.u32 1326507024, %v1824
    %v1840 = vor.u32 %v1838, %v1839
    %vm1841 = vcmp.lt.s32.totalorder %v1822, 1
    %vm1842 = vcmp.lt.s32.totalorder %v1822, 2
    %vm1843 = vcmp.lt.s32.totalorder %v1822, 3
    %vm1844 = vcmp.lt.s32.totalorder %v1822, 4
    %v1845 = vsel %vm1841, %v1825, %v1828
    %v1846 = vsel %vm1844, %v1834, 2102212464
    %v1847 = vsel %vm1843, %v1831, %v1846
    %v1848 = vsel %vm1842, %v1845, %v1847
    %v1849 = vsel %vm1841, %v1828, %v1831
    %v1850 = vsel %vm1844, %v1837, 920167782
    %v1851 = vsel %vm1843, %v1834, %v1850
    %v1852 = vsel %vm1842, %v1849, %v1851
    %v1853 = vsel %vm1841, %v1831, %v1834
    %v1854 = vsel %vm1844, %v1840, 1326507024
    %v1855 = vsel %vm1843, %v1837, %v1854
    %v1856 = vsel %vm1842, %v1853, %v1855
    %v1857 = vshll.u32 %v1817, 8
    %v1858 = vmul.u32.u64.compose %v1857, %v1856
    %v1859 = vextract.low.u32 %v1858
    %v1860 = vextract.high.u32 %v1858
    %v1861 = vmul.u32.u64.compose %v1857, %v1852
    %v1862 = vextract.low.u32 %v1861
    %v1863 = vextract.high.u32 %v1861
    %v1864 = vmul.u32 %v1857, %v1848
    %v1865 = vadd.s32 %v1860, %v1862
    %vm1866 = vc.u32 %v1860, %v1862
    %v1867 = vadd.s32 %v1863, 1
    %v1868 = vsel %vm1866, %v1867, %v1863
    %v1869 = vadd.s32 %v1864, %v1868
    %v1870 = vadd.s32 %v1869, 536870912
    %v1871 = vshrl.u32 %v1870, 30
    %v1872 = vshll.u32 %v1871, 30
    %v1873 = vsub.s32 %v1869, %v1872
    %vm1874 = vcmp.lt.s32.totalorder %v1873, 0
    %v1875 = vsub.s32 0, %v1873
    %v1876 = vsel %vm1874, %v1875, %v1873
    %v1877 = vclz %v1876
    %v1878 = vsub.s32 %v1877, 2
    %vm1879 = vcmp.gt.s32.totalorder 0, %v1878
    %v1880 = vsel %vm1879, 0, %v1878
    %v1881 = vsub.s32 32, %v1880
    %v1882 = vshll.u32 %v1873, %v1880
    %v1883 = vshrl.u32 %v1865, %v1881
    %v1884 = vor.u32 %v1882, %v1883
    %v1885 = vsub.s32 4294967266, %v1880
    %v1886 = vadd.s32 %v1885, 127
    %v1887 = vshll.u32 %v1886, 23
    %v1888 = vor.u32 4788187, %v1887
    %v1889 = vand.u32 2147483647, %v1888
    %v1891 = vcvt.s32.f32 %v1884
    %v1892 = vmul.f32 %v1891, %v1889
    %v1893 = vxor.u32 %v1892, 2147483648
    %v1894 = vsel %vm1811, %v1893, %v1892
    %v1895 = vsub.s32 4, %v1871
    %v1896 = vsel %vm1811, %v1895, %v1871
    %v1897 = vsel %vm1810, %v49, %v1894
    %v1898 = vsel %vm1810, 0, %v1896
    %v1899 = vcosq.f32.pop %v1897
    %v1900 = vsinq.f32.pop %v1897
    %vm1901 = vweird.f32 %v49
    %v1902 = vadd.s32 %v1898, 3
    %v1903 = vand.u32 %v1902, 3
    %vm1904 = vcmp.lt.s32.totalorder %v1903, 2
    %vm1905 = vcmp.eq.s32.totalorder %v1903, 0
    %v1906 = vxor.u32 %v1900, 2147483648
    %v1907 = vsel %vm1905, %v1899, %v1906
    %vm1908 = vcmp.eq.s32.totalorder %v1903, 2
    %v1909 = vxor.u32 %v1899, 2147483648
    %v1910 = vsel %vm1908, %v1909, %v1900
    %v1911 = vsel %vm1904, %v1907, %v1910
    %v1912 = vsel %vm1901, nan, %v1911
    %v1914 = vlaneseq
    %v1915 = vshrl.u32 %v1914, 7
    %v1916 = vsub.s32 0, %v1915
    %v1917 = vrot.slane %v152, %v1916
    %v1919 = vmul.f32 %v1917, %v359
    %v1920 = vmul.f32 %v1917, %v462
    %v1921 = vmul.f32 %v1917, %v565
    %v1922 = vmul.f32 %v1917, %v668
    %v1923 = vmul.f32 %v1917, %v771
    %v1924 = vmul.f32 %v1917, %v874
    %v1925 = vmul.f32 %v1917, %v977
    %v1926 = vmul.f32 %v1917, %v1080
    %v1928 = vlaneseq
    %v1929 = vshrl.u32 %v1928, 7
    %v1930 = vsub.s32 0, %v1929
    %v1931 = vrot.slane %v256, %v1930
    %v1933 = vmul.f32 %v1931, %v1184
    %v1934 = vmul.f32 %v1931, %v1288
    %v1935 = vmul.f32 %v1931, %v1392
    %v1936 = vmul.f32 %v1931, %v1496
    %v1937 = vmul.f32 %v1931, %v1600
    %v1938 = vmul.f32 %v1931, %v1704
    %v1939 = vmul.f32 %v1931, %v1808
    %v1940 = vmul.f32 %v1931, %v1912
    %v1941 = vsub.f32 %v1919, %v1933
    %v1942 = vsub.f32 %v1920, %v1934
    %v1943 = vsub.f32 %v1921, %v1935
    %v1944 = vsub.f32 %v1922, %v1936
    %v1945 = vsub.f32 %v1923, %v1937
    %v1946 = vsub.f32 %v1924, %v1938
    %v1947 = vsub.f32 %v1925, %v1939
    %v1948 = vsub.f32 %v1926, %v1940
    %1949 = vst [vmem:[#allocation7] sm:$0xff] %v1941
    %1950 = vst [vmem:[#allocation7 + $0x8] sm:$0xff] %v1942
    %1951 = vst [vmem:[#allocation7 + $0x10] sm:$0xff] %v1943
    %1952 = vst [vmem:[#allocation7 + $0x18] sm:$0xff] %v1944
    %1953 = vst [vmem:[#allocation7 + $0x20] sm:$0xff] %v1945
    %1954 = vst [vmem:[#allocation7 + $0x28] sm:$0xff] %v1946
    %1955 = vst [vmem:[#allocation7 + $0x30] sm:$0xff] %v1947
    %1956 = vst [vmem:[#allocation7 + $0x38] sm:$0xff] %v1948
    %v1957 = vmul.f32 %v1931, %v359
    %v1958 = vmul.f32 %v1931, %v462
    %v1959 = vmul.f32 %v1931, %v565
    %v1960 = vmul.f32 %v1931, %v668
    %v1961 = vmul.f32 %v1931, %v771
    %v1962 = vmul.f32 %v1931, %v874
    %v1963 = vmul.f32 %v1931, %v977
    %v1964 = vmul.f32 %v1931, %v1080
    %v1965 = vmul.f32 %v1917, %v1184
    %v1966 = vmul.f32 %v1917, %v1288
    %v1967 = vmul.f32 %v1917, %v1392
    %v1968 = vmul.f32 %v1917, %v1496
    %v1969 = vmul.f32 %v1917, %v1600
    %v1970 = vmul.f32 %v1917, %v1704
    %v1971 = vmul.f32 %v1917, %v1808
    %v1972 = vmul.f32 %v1917, %v1912
    %v1973 = vadd.f32 %v1957, %v1965
    %v1974 = vadd.f32 %v1958, %v1966
    %v1975 = vadd.f32 %v1959, %v1967
    %v1976 = vadd.f32 %v1960, %v1968
    %v1977 = vadd.f32 %v1961, %v1969
    %v1978 = vadd.f32 %v1962, %v1970
    %v1979 = vadd.f32 %v1963, %v1971
    %v1980 = vadd.f32 %v1964, %v1972
    %1981 = vst [vmem:[#allocation8] sm:$0xff] %v1973
    %1982 = vst [vmem:[#allocation8 + $0x8] sm:$0xff] %v1974
    %1983 = vst [vmem:[#allocation8 + $0x10] sm:$0xff] %v1975
    %1984 = vst [vmem:[#allocation8 + $0x18] sm:$0xff] %v1976
    %1985 = vst [vmem:[#allocation8 + $0x20] sm:$0xff] %v1977
    %1986 = vst [vmem:[#allocation8 + $0x28] sm:$0xff] %v1978
    %1987 = vst [vmem:[#allocation8 + $0x30] sm:$0xff] %v1979
    %1988 = vst [vmem:[#allocation8 + $0x38] sm:$0xff] %v1980
    // Predicated region
    $region18: #{tpu_custom_call.1} parent=1 // pred_check
      _
    $region19: #{tpu_custom_call.1} parent=1 // pred_check_branch
      %1990 = sbr.rel (0) target = $region21
    $region20: #{tpu_custom_call.1} parent=1 // pred_region
      %s1992 = ssub.s32 1024, 1024
      %1993 = vsyncadd [#allocation4], %s1992
      %s1994 = sshll.u32 [#allocation7], 4
      %s1995 = int_to_ptr.vmem [resolvable:$true] %s1994
      %2000 = dma.vmem_to_hbm [thread:$0]  %s1995, 1024, %s2, [#allocation4], 128, 128, 8
    $region21: #{tpu_custom_call.1} parent=1 // pred_fallthru
      _
    // Predicated region
    $region22: #{tpu_custom_call.1} parent=1 // pred_check
      _
    $region23: #{tpu_custom_call.1} parent=1 // pred_check_branch
      %2002 = sbr.rel (0) target = $region25
    $region24: #{tpu_custom_call.1} parent=1 // pred_region
      %s2004 = ssub.s32 1024, 1024
      %2005 = vsyncadd [#allocation9], %s2004
      %s2006 = sshll.u32 [#allocation8], 4
      %s2007 = int_to_ptr.vmem [resolvable:$true] %s2006
      %2012 = dma.vmem_to_hbm [thread:$0]  %s2007, 1024, %s3, [#allocation9], 128, 128, 8
    $region25: #{tpu_custom_call.1} parent=1 // pred_fallthru
      _
    // Predicated region
    $region26: #{tpu_custom_call.1} parent=1 // pred_check
      _
    $region27: #{tpu_custom_call.1} parent=1 // pred_check_branch
      %2014 = sbr.rel (0) target = $region29
    $region28: #{tpu_custom_call.1} parent=1 // pred_region
      %2015 = dma.done [#allocation4], 1024
    $region29: #{tpu_custom_call.1} parent=1 // pred_fallthru
      _
    // Predicated region
    $region30: #{tpu_custom_call.1} parent=1 // pred_check
      _
    $region31: #{tpu_custom_call.1} parent=1 // pred_check_branch
      %2017 = sbr.rel (0) target = $region33
    $region32: #{tpu_custom_call.1} parent=1 // pred_region
      %2018 = dma.done [#allocation9], 1024
    $region33: #{tpu_custom_call.1} parent=1 // pred_fallthru
      _
    %2019 = vsyncpa [#allocation3], 1
    %2020 = vsyncpa [#allocation6], 1
    %2021 = vsyncpa [#allocation4], 1
    %2022 = vsyncpa [#allocation9], 1

</llo_original>
